<compile_context>
chip_gen: v7x
topology: tpu7x:2x2x1
jax: 0.10.0
libtpu: 0.0.40
codegen_flags: <defaults>
</compile_context>

<pallas_src>
import numpy as np
import jax
import jax.numpy as jnp
from jax import lax
from jax.experimental import pallas as pl
from jax.experimental.pallas import tpu as pltpu

# ----------------------- module configuration ("globals" of the reference) -----------------------
FRAME_LEN = 256                 # frame_len  (small-shape version of the 512 default)
FRAME_HOP = 128                 # frame_hop  (= FRAME_LEN // 2, required by the chunk framing)
FFT_SIZE  = 256                 # num_fft
NEFF      = FFT_SIZE // 2 + 1   # num_bins = 129
FPAD      = 256                 # NEFF padded up to a multiple of 128 lanes
MIC_PAIRS = [(0, 1), (1, 2), (2, 3), (0, 3)]   # `mic_pairs` global used by DFComputer.__init__
EPSILON   = 1e-8                # DFComputer.epsilon
LN_EPS    = 1e-5                # torch.nn.LayerNorm default eps
STFT_EPS  = 1e-10               # STFT magnitude epsilon


# ------------------------------ parameter construction (init_kernel) ------------------------------
def init_stft_kernels(frame_len, frame_hop, num_fft):
    """Reproduces init_kernel(): real / imag analysis matrices, shape [frame_len, NEFF].
    torch.hann_window(frame_len) is periodic: 0.5*(1 - cos(2*pi*n/N)); the module takes its sqrt."""
    fft_size = num_fft
    n = np.arange(frame_len, dtype=np.float64)
    window = np.sqrt(0.5 * (1.0 - np.cos(2.0 * np.pi * n / frame_len)))          # sqrt-Hann
    S_ = 0.5 * (fft_size * fft_size / frame_hop) ** 0.5
    dft = np.fft.rfft(np.eye(fft_size) / S_, axis=-1)[:frame_len]                # [L, NEFF] complex
    kr = (np.real(dft) * window[:, None]).astype(np.float32)
    ki = (np.imag(dft) * window[:, None]).astype(np.float32)
    return jnp.asarray(kr), jnp.asarray(ki)


def pack_stft_weights(kr, ki):
    """Pack kr|ki into one lane-padded RHS (L, 2*FPAD), split into bf16 hi/lo parts and stack
    them along K so the bf16x3 (Precision.HIGH-equivalent) product becomes a SINGLE K=3*L MXU
    matmul whose partials accumulate inside the MXU (MRF/MRB) instead of on the VPU.
    (The f_lo*w_lo term is dropped - standard bf16x3, ~1e-5 accuracy.)"""
    L, F = kr.shape
    W = jnp.zeros((L, 2 * FPAD), jnp.float32)
    W = W.at[:, :F].set(kr).at[:, FPAD:FPAD + F].set(ki)
    w_hi = W.astype(jnp.bfloat16)
    w_lo = (W - w_hi.astype(jnp.float32)).astype(jnp.bfloat16)
    # kernel LHS is [f_hi | f_lo | f_hi]  ->  matching RHS is [w_hi ; w_hi ; w_lo]
    w_pack = jnp.concatenate([w_hi, w_hi, w_lo], axis=0)        # (3L, 2*FPAD) bf16
    # TODO(synk): 254 of the 512 RHS columns are zero padding; a tighter pack only pays off once
    # the LHS row count is >=256 (it forces an unaligned lane slice of the imag half at lane 129).
    return w_pack, w_hi, w_lo


def _choose_b_blk(B, M, T, target_rows=256):
    """Largest divisor of B such that the STFT matmul sees >= target_rows LHS rows, while keeping
    >= 2 grid steps when possible so both v7x TensorCores get work.  For B=2, M*T=32 this is 1."""
    divs = [d for d in range(1, B + 1) if B % d == 0]
    allowed = [d for d in divs if (B // d) >= 2] or [B]
    for d in allowed:
        if d * M * T >= target_rows:
            return d
    return allowed[-1]


# ------------------------------------ fused forward (Pallas) ------------------------------------
def df_computer_forward(x, w_pack, gamma_p, beta_p):
    """x: [B, M, S] waveform.  Returns (df, magnitude, phase) matching DFComputer.forward
    with in_feature=['LPS', 'IPD'], cosIPD=True, sinIPD=False."""
    B, M, S = x.shape
    assert FRAME_LEN == 2 * FRAME_HOP and S % FRAME_HOP == 0
    C = S // FRAME_HOP            # number of hop-sized chunks
    T = C - 1                     # frames (50% overlap), == (S - FRAME_LEN)//FRAME_HOP + 1
    F, FP = NEFF, FPAD
    I = len(MIC_PAIRS)
    HOP = FRAME_HOP
    L = FRAME_LEN

    B_blk = _choose_b_blk(B, M, T)
    G = B // B_blk
    R = B_blk * M * T             # MXU LHS rows per grid step

    xc = x.reshape(B, M, C, HOP)  # contiguous split of the last dim -> free reshape

    def kernel(xc_ref, w_ref, g_ref, b_ref, df_ref, mag_ref, re_ref, im_ref):
        xc_b = xc_ref[...]                                      # (B_blk, M, C, HOP)
        # ---- framing in-register: frame t = [chunk t | chunk t+1]  (hop = L/2) ----
        a = xc_b[:, :, 0:T, :].reshape(R, HOP)                  # first halves
        b2 = xc_b[:, :, 1:T + 1, :].reshape(R, HOP)             # second halves
        frames = jnp.concatenate([a, b2], axis=-1)              # (R, L) f32

        # ---- STFT: bf16x3 decomposition as ONE K=3L matmul (accumulates in MXU / MRB) ----
        f_hi = frames.astype(jnp.bfloat16)
        f_lo = (frames - f_hi.astype(jnp.float32)).astype(jnp.bfloat16)
        lhs = jnp.concatenate([f_hi, f_lo, f_hi], axis=-1)      # (R, 3L) bf16
        c = jnp.dot(lhs, w_ref[...], preferred_element_type=jnp.float32)   # (R, 2*FP) f32

        # real / imag halves (aligned lane slices), grouped per batch / mic: (B_blk, M, T, FP)
        rp = c[:, 0:FP].reshape(B_blk, M, T, FP)
        ip = c[:, FP:2 * FP].reshape(B_blk, M, T, FP)
        mp = jnp.sqrt(rp * rp + ip * ip + STFT_EPS)

        # ---- lane-dense (T, FP) stores; (F, T) transpose + trim happen in the XLA wrapper ----
        mag_ref[...] = mp
        re_ref[...] = rp
        im_ref[...] = ip

        # ---- LPS + ChannelWiseLayerNorm on mic 0 (masked two-pass stats over the F valid lanes) ----
        lps = jnp.log(mp[:, 0] * mp[:, 0] + EPSILON)            # (B_blk, T, FP)
        lane = lax.broadcasted_iota(jnp.int32, lps.shape, 2)
        valid = lane < F
        inv_f = jnp.float32(1.0 / F)
        mean = jnp.sum(jnp.where(valid, lps, 0.0), axis=-1, keepdims=True) * inv_f
        cent = jnp.where(valid, lps - mean, 0.0)
        var = jnp.sum(cent * cent, axis=-1, keepdims=True) * inv_f
        g = g_ref[...].reshape(1, 1, FP)                        # pad lanes of gamma/beta are 0
        bb = b_ref[...].reshape(1, 1, FP)
        y = (lps - mean) * lax.rsqrt(var + LN_EPS) * g + bb     # (B_blk, T, FP)

        # ---- cos-IPD from real/imag: cos(pl - pr) = (rl*rr + il*ir) / (ml*mr) ----
        # denominator >= STFT_EPS (never zero); division replaced by EUP approx reciprocal.
        chans = [y]
        for (le, ri) in MIC_PAIRS:                              # static, compile-time pairs
            num = rp[:, le] * rp[:, ri] + ip[:, le] * ip[:, ri]
            den = mp[:, le] * mp[:, ri]
            chans.append(num * pl.reciprocal(den, approx=True))
        df_ref[...] = jnp.stack(chans, axis=1)                  # (B_blk, 1+I, T, FP), one store

    df_p, mag_p, re_p, im_p = pl.pallas_call(
        kernel,
        out_shape=(jax.ShapeDtypeStruct((B, 1 + I, T, FP), jnp.float32),
                   jax.ShapeDtypeStruct((B, M, T, FP), jnp.float32),
                   jax.ShapeDtypeStruct((B, M, T, FP), jnp.float32),
                   jax.ShapeDtypeStruct((B, M, T, FP), jnp.float32)),
        grid=(G,),
        in_specs=[pl.BlockSpec((B_blk, M, C, HOP), lambda g: (g, 0, 0, 0)),
                  pl.BlockSpec((3 * L, 2 * FP), lambda g: (0, 0)),
                  pl.BlockSpec((1, FP), lambda g: (0, 0)),
                  pl.BlockSpec((1, FP), lambda g: (0, 0))],
        out_specs=[pl.BlockSpec((B_blk, 1 + I, T, FP), lambda g: (g, 0, 0, 0)),
                   pl.BlockSpec((B_blk, M, T, FP), lambda g: (g, 0, 0, 0)),
                   pl.BlockSpec((B_blk, M, T, FP), lambda g: (g, 0, 0, 0)),
                   pl.BlockSpec((B_blk, M, T, FP), lambda g: (g, 0, 0, 0))],
        compiler_params=pltpu.CompilerParams(dimension_semantics=("parallel",)),
    )(xc, w_pack, gamma_p, beta_p)

    # ---- tiny fused XLA epilogue: trim pad lanes, transpose to torch (F, T), merge df, atan2 ----
    # TODO(synk): atan2 has no guaranteed Mosaic lowering; phase stays a tiny fused XLA elementwise op.
    mag = jnp.swapaxes(mag_p[..., :F], -1, -2)                              # (B, M, F, T)
    phase = jnp.swapaxes(jnp.arctan2(im_p[..., :F], re_p[..., :F]), -1, -2)  # (B, M, F, T)
    df = jnp.swapaxes(df_p[..., :F], -1, -2).reshape(B, (1 + I) * F, T)      # (B, (1+I)*F, T)
    return df, mag, phase


# --------------------------------------- pure-JAX reference ---------------------------------------
def reference(x, kr, ki, w_hi, w_lo, gamma, beta):
    """Straightforward formulation (gather framing, atan2, cos of phase difference, two-pass LN,
    torch-style transposes/concat).  The STFT real/imag use the SAME bf16x3 decomposition as the
    kernel so the check isolates kernel correctness; the absolute accuracy of bf16x3 itself is
    validated separately against an exact-f32 STFT (mag_f32)."""
    B, M, S = x.shape
    L, F = kr.shape
    T = (S - L) // FRAME_HOP + 1
    all_s = x.reshape(B * M, S)
    idx = FRAME_HOP * jnp.arange(T)[:, None] + jnp.arange(L)[None, :]
    fr = all_s[:, idx].reshape(B * M * T, L)                     # unfold framing

    f_hi = fr.astype(jnp.bfloat16)
    f_lo = (fr - f_hi.astype(jnp.float32)).astype(jnp.bfloat16)
    c = (jnp.dot(f_hi, w_hi, preferred_element_type=jnp.float32)
         + jnp.dot(f_lo, w_hi, preferred_element_type=jnp.float32)
         + jnp.dot(f_hi, w_lo, preferred_element_type=jnp.float32))
    r = c[:, 0:F].reshape(B, M, T, F)
    i = c[:, FPAD:FPAD + F].reshape(B, M, T, F)

    # exact f32 STFT (ground truth for the precision sanity check)
    r32 = jnp.einsum('nl,lf->nf', fr, kr, precision=lax.Precision.HIGHEST).reshape(B, M, T, F)
    i32 = jnp.einsum('nl,lf->nf', fr, ki, precision=lax.Precision.HIGHEST).reshape(B, M, T, F)
    mag_f32 = jnp.sqrt(r32 * r32 + i32 * i32 + STFT_EPS)

    m = jnp.sqrt(r * r + i * i + STFT_EPS)
    p = jnp.arctan2(i, r)
    lps = jnp.log(m[:, 0] ** 2 + EPSILON)
    mean = lps.mean(-1, keepdims=True)
    var = ((lps - mean) ** 2).mean(-1, keepdims=True)            # two-pass biased var (torch LN)
    lps_n = (lps - mean) / jnp.sqrt(var + LN_EPS) * gamma + beta
    left = [p0 for p0, _ in MIC_PAIRS]
    right = [p1 for _, p1 in MIC_PAIRS]
    cos_ipd = jnp.cos(p[:, left] - p[:, right])                  # true trig formulation
    df = jnp.concatenate(
        [jnp.swapaxes(lps_n, 1, 2),
         cos_ipd.transpose(0, 1, 3, 2).reshape(B, -1, T)], axis=1)
    return (df, m.transpose(0, 1, 3, 2), p.transpose(0, 1, 3, 2),
            mag_f32.transpose(0, 1, 3, 2))


# ----------------------------------------------- main -----------------------------------------------
if __name__ == "__main__":
    B, M, S = 2, 4, 1152                       # batch, mics (channels), waveform samples
    T = (S - FRAME_LEN) // FRAME_HOP + 1       # = 8 frames

    key = jax.random.PRNGKey(0)
    kx, kg, kb = jax.random.split(key, 3)
    x = jax.random.normal(kx, (B, M, S), dtype=jnp.float32)

    # deterministic synthetic parameters
    kr, ki = init_stft_kernels(FRAME_LEN, FRAME_HOP, FFT_SIZE)              # STFT analysis matrices
    w_pack, w_hi, w_lo = pack_stft_weights(kr, ki)                          # packed bf16x3 RHS
    gamma = 1.0 + 0.1 * jax.random.normal(kg, (NEFF,), dtype=jnp.float32)   # LayerNorm weight
    beta = 0.1 * jax.random.normal(kb, (NEFF,), dtype=jnp.float32)          # LayerNorm bias
    gamma_p = jnp.zeros((1, FPAD), jnp.float32).at[0, :NEFF].set(gamma)
    beta_p = jnp.zeros((1, FPAD), jnp.float32).at[0, :NEFF].set(beta)

    fwd = jax.jit(df_computer_forward)
    df, mag, ph = fwd(x, w_pack, gamma_p, beta_p)
    jax.block_until_ready((df, mag, ph))

    # ----- correctness checks -----
    df_r, mag_r, ph_r, mag_f32 = reference(x, kr, ki, w_hi, w_lo, gamma, beta)
    np.testing.assert_allclose(np.asarray(df), np.asarray(df_r), rtol=2e-3, atol=2e-3)
    np.testing.assert_allclose(np.asarray(mag), np.asarray(mag_r), rtol=2e-3, atol=2e-3)
    # wrap-aware phase comparison (phase of a complex number is defined modulo 2*pi)
    dphi = np.angle(np.exp(1j * (np.asarray(ph) - np.asarray(ph_r))))
    np.testing.assert_allclose(dphi, 0.0, atol=2e-3)
    # bf16x3 (HIGH-equivalent) STFT vs exact f32 STFT: well-conditioned absolute-accuracy check
    np.testing.assert_allclose(np.asarray(mag), np.asarray(mag_f32), rtol=2e-3, atol=2e-3)

    assert df.shape == (B, NEFF * (1 + len(MIC_PAIRS)), T)
    assert mag.shape == (B, M, NEFF, T) and ph.shape == (B, M, NEFF, T)
    print("KERNEL_OK")
</pallas_src>

<mosaic_0001>
module attributes {stable_mosaic.version = 11 : i64} {
  func.func @kernel(%arg0: i32, %arg1: memref<1x4x9x128xf32, #tpu.memory_space<vmem>>, %arg2: memref<768x512xbf16, #tpu.memory_space<vmem>>, %arg3: memref<1x256xf32, #tpu.memory_space<vmem>>, %arg4: memref<1x256xf32, #tpu.memory_space<vmem>>, %arg5: memref<1x5x8x256xf32, #tpu.memory_space<vmem>>, %arg6: memref<1x4x8x256xf32, #tpu.memory_space<vmem>>, %arg7: memref<1x4x8x256xf32, #tpu.memory_space<vmem>>, %arg8: memref<1x4x8x256xf32, #tpu.memory_space<vmem>>) attributes {dimension_semantics = [#tpu.dimension_semantics<parallel>], iteration_bounds = array<i64: 2>, scalar_prefetch = 0 : i64, scratch_operands = 0 : i64, tpu.core_type = #tpu.core_type<tc>, window_params = [{transform_indices = @transform_0, window_bounds = array<i64: 1, 4, 9, 128>}, {pipeline_mode = #tpu.pipeline_mode<synchronous>, transform_indices = @transform_1, window_bounds = array<i64: 768, 512>}, {pipeline_mode = #tpu.pipeline_mode<synchronous>, transform_indices = @transform_2, window_bounds = array<i64: 1, 256>}, {pipeline_mode = #tpu.pipeline_mode<synchronous>, transform_indices = @transform_3, window_bounds = array<i64: 1, 256>}, {transform_indices = @transform_4, window_bounds = array<i64: 1, 5, 8, 256>}, {transform_indices = @transform_5, window_bounds = array<i64: 1, 4, 8, 256>}, {transform_indices = @transform_6, window_bounds = array<i64: 1, 4, 8, 256>}, {transform_indices = @transform_7, window_bounds = array<i64: 1, 4, 8, 256>}]} {
    %c0 = arith.constant 0 : index
    %c0_0 = arith.constant 0 : index
    %c0_1 = arith.constant 0 : index
    %c0_2 = arith.constant 0 : index
    %0 = vector.load %arg1[%c0, %c0_0, %c0_1, %c0_2] : memref<1x4x9x128xf32, #tpu.memory_space<vmem>>, vector<1x4x9x128xf32>
    %1 = vector.extract_strided_slice %0 {offsets = [0, 0, 0, 0], sizes = [1, 4, 8, 128], strides = [1, 1, 1, 1]} : vector<1x4x9x128xf32> to vector<1x4x8x128xf32>
    %2 = vector.shape_cast %1 : vector<1x4x8x128xf32> to vector<32x128xf32>
    %3 = vector.extract_strided_slice %0 {offsets = [0, 0, 1, 0], sizes = [1, 4, 8, 128], strides = [1, 1, 1, 1]} : vector<1x4x9x128xf32> to vector<1x4x8x128xf32>
    %4 = vector.shape_cast %3 : vector<1x4x8x128xf32> to vector<32x128xf32>
    %5 = tpu.concatenate %2, %4 in 1 : vector<32x128xf32>, vector<32x128xf32> -> vector<32x256xf32>
    %6 = arith.truncf %5 : vector<32x256xf32> to vector<32x256xbf16>
    %7 = arith.extf %6 : vector<32x256xbf16> to vector<32x256xf32>
    %8 = arith.subf %5, %7 : vector<32x256xf32>
    %9 = arith.truncf %8 : vector<32x256xf32> to vector<32x256xbf16>
    %10 = tpu.concatenate %6, %9, %6 in 1 : vector<32x256xbf16>, vector<32x256xbf16>, vector<32x256xbf16> -> vector<32x768xbf16>
    %c0_3 = arith.constant 0 : index
    %c0_4 = arith.constant 0 : index
    %11 = vector.load %arg2[%c0_3, %c0_4] : memref<768x512xbf16, #tpu.memory_space<vmem>>, vector<768x512xbf16>
    %cst = arith.constant dense<0.000000e+00> : vector<32x512xf32>
    %12 = tpu.matmul %10, %11, %cst {dimension_numbers = #tpu.dot_dimension_numbers<[1], [0], [0], [1], [0, 0, 1, 1], [], []>} : vector<32x768xbf16>, vector<768x512xbf16>, vector<32x512xf32> -> vector<32x512xf32>
    %13 = vector.extract_strided_slice %12 {offsets = [0, 0], sizes = [32, 256], strides = [1, 1]} : vector<32x512xf32> to vector<32x256xf32>
    %14 = vector.shape_cast %13 : vector<32x256xf32> to vector<1x4x8x256xf32>
    %15 = vector.extract_strided_slice %12 {offsets = [0, 256], sizes = [32, 256], strides = [1, 1]} : vector<32x512xf32> to vector<32x256xf32>
    %16 = vector.shape_cast %15 : vector<32x256xf32> to vector<1x4x8x256xf32>
    %17 = arith.mulf %14, %14 : vector<1x4x8x256xf32>
    %18 = arith.mulf %16, %16 : vector<1x4x8x256xf32>
    %19 = arith.addf %17, %18 : vector<1x4x8x256xf32>
    %cst_5 = arith.constant 1.000000e-10 : f32
    %20 = vector.broadcast %cst_5 : f32 to vector<1x4x8x256xf32>
    %21 = arith.addf %19, %20 : vector<1x4x8x256xf32>
    %22 = math.sqrt %21 : vector<1x4x8x256xf32>
    %c0_6 = arith.constant 0 : index
    %c0_7 = arith.constant 0 : index
    %c0_8 = arith.constant 0 : index
    %c0_9 = arith.constant 0 : index
    %23 = vector.load %arg6[%c0_6, %c0_7, %c0_8, %c0_9] : memref<1x4x8x256xf32, #tpu.memory_space<vmem>>, vector<1x4x8x256xf32>
    tpu.vector_store %arg6[%c0_6, %c0_7, %c0_8, %c0_9], %22 {strides = array<i32>} : memref<1x4x8x256xf32, #tpu.memory_space<vmem>>, vector<1x4x8x256xf32>,
    %c0_10 = arith.constant 0 : index
    %c0_11 = arith.constant 0 : index
    %c0_12 = arith.constant 0 : index
    %c0_13 = arith.constant 0 : index
    %24 = vector.load %arg7[%c0_10, %c0_11, %c0_12, %c0_13] : memref<1x4x8x256xf32, #tpu.memory_space<vmem>>, vector<1x4x8x256xf32>
    tpu.vector_store %arg7[%c0_10, %c0_11, %c0_12, %c0_13], %14 {strides = array<i32>} : memref<1x4x8x256xf32, #tpu.memory_space<vmem>>, vector<1x4x8x256xf32>,
    %c0_14 = arith.constant 0 : index
    %c0_15 = arith.constant 0 : index
    %c0_16 = arith.constant 0 : index
    %c0_17 = arith.constant 0 : index
    %25 = vector.load %arg8[%c0_14, %c0_15, %c0_16, %c0_17] : memref<1x4x8x256xf32, #tpu.memory_space<vmem>>, vector<1x4x8x256xf32>
    tpu.vector_store %arg8[%c0_14, %c0_15, %c0_16, %c0_17], %16 {strides = array<i32>} : memref<1x4x8x256xf32, #tpu.memory_space<vmem>>, vector<1x4x8x256xf32>,
    %26 = vector.extract_strided_slice %22 {offsets = [0, 0, 0, 0], sizes = [1, 1, 8, 256], strides = [1, 1, 1, 1]} : vector<1x4x8x256xf32> to vector<1x1x8x256xf32>
    %27 = vector.shape_cast %26 : vector<1x1x8x256xf32> to vector<1x8x256xf32>
    %28 = vector.extract_strided_slice %22 {offsets = [0, 0, 0, 0], sizes = [1, 1, 8, 256], strides = [1, 1, 1, 1]} : vector<1x4x8x256xf32> to vector<1x1x8x256xf32>
    %29 = vector.shape_cast %28 : vector<1x1x8x256xf32> to vector<1x8x256xf32>
    %30 = arith.mulf %27, %29 : vector<1x8x256xf32>
    %cst_18 = arith.constant 9.99999993E-9 : f32
    %31 = vector.broadcast %cst_18 : f32 to vector<1x8x256xf32>
    %32 = arith.addf %30, %31 : vector<1x8x256xf32>
    %33 = math.log %32 : vector<1x8x256xf32>
    %34 = tpu.iota {dimensions = array<i32: 2>} : vector<1x8x256xi32>
    %c129_i32 = arith.constant 129 : i32
    %35 = vector.broadcast %c129_i32 : i32 to vector<1x8x256xi32>
    %36 = arith.cmpi slt, %34, %35 : vector<1x8x256xi32>
    %cst_19 = arith.constant 0.000000e+00 : f32
    %37 = vector.broadcast %cst_19 : f32 to vector<1x8x256xf32>
    %38 = arith.select %36, %33, %37 : vector<1x8x256xi1>, vector<1x8x256xf32>
    %cst_20 = arith.constant dense<0.000000e+00> : vector<1x8xf32>
    %39 = vector.multi_reduction <add>, %38, %cst_20 [2] : vector<1x8x256xf32> to vector<1x8xf32>
    %40 = vector.shape_cast %39 : vector<1x8xf32> to vector<1x8x1xf32>
    %cst_21 = arith.constant 0.00775193795 : f32
    %41 = vector.broadcast %cst_21 : f32 to vector<1x8x1xf32>
    %42 = arith.mulf %40, %41 : vector<1x8x1xf32>
    %43 = vector.broadcast %42 : vector<1x8x1xf32> to vector<1x8x256xf32>
    %44 = arith.subf %33, %43 : vector<1x8x256xf32>
    %cst_22 = arith.constant 0.000000e+00 : f32
    %45 = vector.broadcast %cst_22 : f32 to vector<1x8x256xf32>
    %46 = arith.select %36, %44, %45 : vector<1x8x256xi1>, vector<1x8x256xf32>
    %47 = arith.mulf %46, %46 : vector<1x8x256xf32>
    %cst_23 = arith.constant dense<0.000000e+00> : vector<1x8xf32>
    %48 = vector.multi_reduction <add>, %47, %cst_23 [2] : vector<1x8x256xf32> to vector<1x8xf32>
    %49 = vector.shape_cast %48 : vector<1x8xf32> to vector<1x8x1xf32>
    %cst_24 = arith.constant 0.00775193795 : f32
    %50 = vector.broadcast %cst_24 : f32 to vector<1x8x1xf32>
    %51 = arith.mulf %49, %50 : vector<1x8x1xf32>
    %c0_25 = arith.constant 0 : index
    %c0_26 = arith.constant 0 : index
    %52 = vector.load %arg3[%c0_25, %c0_26] : memref<1x256xf32, #tpu.memory_space<vmem>>, vector<1x256xf32>
    %53 = vector.shape_cast %52 : vector<1x256xf32> to vector<1x1x256xf32>
    %c0_27 = arith.constant 0 : index
    %c0_28 = arith.constant 0 : index
    %54 = vector.load %arg4[%c0_27, %c0_28] : memref<1x256xf32, #tpu.memory_space<vmem>>, vector<1x256xf32>
    %55 = vector.shape_cast %54 : vector<1x256xf32> to vector<1x1x256xf32>
    %56 = vector.broadcast %42 : vector<1x8x1xf32> to vector<1x8x256xf32>
    %57 = arith.subf %33, %56 : vector<1x8x256xf32>
    %cst_29 = arith.constant 9.99999974E-6 : f32
    %58 = vector.broadcast %cst_29 : f32 to vector<1x8x1xf32>
    %59 = arith.addf %51, %58 : vector<1x8x1xf32>
    %60 = math.rsqrt %59 : vector<1x8x1xf32>
    %61 = vector.broadcast %60 : vector<1x8x1xf32> to vector<1x8x256xf32>
    %62 = arith.mulf %57, %61 : vector<1x8x256xf32>
    %63 = vector.broadcast %53 : vector<1x1x256xf32> to vector<1x8x256xf32>
    %64 = arith.mulf %62, %63 : vector<1x8x256xf32>
    %65 = vector.broadcast %55 : vector<1x1x256xf32> to vector<1x8x256xf32>
    %66 = arith.addf %64, %65 : vector<1x8x256xf32>
    %67 = vector.extract_strided_slice %14 {offsets = [0, 0, 0, 0], sizes = [1, 1, 8, 256], strides = [1, 1, 1, 1]} : vector<1x4x8x256xf32> to vector<1x1x8x256xf32>
    %68 = vector.shape_cast %67 : vector<1x1x8x256xf32> to vector<1x8x256xf32>
    %69 = vector.extract_strided_slice %14 {offsets = [0, 1, 0, 0], sizes = [1, 1, 8, 256], strides = [1, 1, 1, 1]} : vector<1x4x8x256xf32> to vector<1x1x8x256xf32>
    %70 = vector.shape_cast %69 : vector<1x1x8x256xf32> to vector<1x8x256xf32>
    %71 = arith.mulf %68, %70 : vector<1x8x256xf32>
    %72 = vector.extract_strided_slice %16 {offsets = [0, 0, 0, 0], sizes = [1, 1, 8, 256], strides = [1, 1, 1, 1]} : vector<1x4x8x256xf32> to vector<1x1x8x256xf32>
    %73 = vector.shape_cast %72 : vector<1x1x8x256xf32> to vector<1x8x256xf32>
    %74 = vector.extract_strided_slice %16 {offsets = [0, 1, 0, 0], sizes = [1, 1, 8, 256], strides = [1, 1, 1, 1]} : vector<1x4x8x256xf32> to vector<1x1x8x256xf32>
    %75 = vector.shape_cast %74 : vector<1x1x8x256xf32> to vector<1x8x256xf32>
    %76 = arith.mulf %73, %75 : vector<1x8x256xf32>
    %77 = arith.addf %71, %76 : vector<1x8x256xf32>
    %78 = vector.extract_strided_slice %22 {offsets = [0, 0, 0, 0], sizes = [1, 1, 8, 256], strides = [1, 1, 1, 1]} : vector<1x4x8x256xf32> to vector<1x1x8x256xf32>
    %79 = vector.shape_cast %78 : vector<1x1x8x256xf32> to vector<1x8x256xf32>
    %80 = vector.extract_strided_slice %22 {offsets = [0, 1, 0, 0], sizes = [1, 1, 8, 256], strides = [1, 1, 1, 1]} : vector<1x4x8x256xf32> to vector<1x1x8x256xf32>
    %81 = vector.shape_cast %80 : vector<1x1x8x256xf32> to vector<1x8x256xf32>
    %82 = arith.mulf %79, %81 : vector<1x8x256xf32>
    %83 = tpu.reciprocal %82 {approx = true} : vector<1x8x256xf32> -> vector<1x8x256xf32>
    %84 = arith.mulf %77, %83 : vector<1x8x256xf32>
    %85 = vector.extract_strided_slice %14 {offsets = [0, 1, 0, 0], sizes = [1, 1, 8, 256], strides = [1, 1, 1, 1]} : vector<1x4x8x256xf32> to vector<1x1x8x256xf32>
    %86 = vector.shape_cast %85 : vector<1x1x8x256xf32> to vector<1x8x256xf32>
    %87 = vector.extract_strided_slice %14 {offsets = [0, 2, 0, 0], sizes = [1, 1, 8, 256], strides = [1, 1, 1, 1]} : vector<1x4x8x256xf32> to vector<1x1x8x256xf32>
    %88 = vector.shape_cast %87 : vector<1x1x8x256xf32> to vector<1x8x256xf32>
    %89 = arith.mulf %86, %88 : vector<1x8x256xf32>
    %90 = vector.extract_strided_slice %16 {offsets = [0, 1, 0, 0], sizes = [1, 1, 8, 256], strides = [1, 1, 1, 1]} : vector<1x4x8x256xf32> to vector<1x1x8x256xf32>
    %91 = vector.shape_cast %90 : vector<1x1x8x256xf32> to vector<1x8x256xf32>
    %92 = vector.extract_strided_slice %16 {offsets = [0, 2, 0, 0], sizes = [1, 1, 8, 256], strides = [1, 1, 1, 1]} : vector<1x4x8x256xf32> to vector<1x1x8x256xf32>
    %93 = vector.shape_cast %92 : vector<1x1x8x256xf32> to vector<1x8x256xf32>
    %94 = arith.mulf %91, %93 : vector<1x8x256xf32>
    %95 = arith.addf %89, %94 : vector<1x8x256xf32>
    %96 = vector.extract_strided_slice %22 {offsets = [0, 1, 0, 0], sizes = [1, 1, 8, 256], strides = [1, 1, 1, 1]} : vector<1x4x8x256xf32> to vector<1x1x8x256xf32>
    %97 = vector.shape_cast %96 : vector<1x1x8x256xf32> to vector<1x8x256xf32>
    %98 = vector.extract_strided_slice %22 {offsets = [0, 2, 0, 0], sizes = [1, 1, 8, 256], strides = [1, 1, 1, 1]} : vector<1x4x8x256xf32> to vector<1x1x8x256xf32>
    %99 = vector.shape_cast %98 : vector<1x1x8x256xf32> to vector<1x8x256xf32>
    %100 = arith.mulf %97, %99 : vector<1x8x256xf32>
    %101 = tpu.reciprocal %100 {approx = true} : vector<1x8x256xf32> -> vector<1x8x256xf32>
    %102 = arith.mulf %95, %101 : vector<1x8x256xf32>
    %103 = vector.extract_strided_slice %14 {offsets = [0, 2, 0, 0], sizes = [1, 1, 8, 256], strides = [1, 1, 1, 1]} : vector<1x4x8x256xf32> to vector<1x1x8x256xf32>
    %104 = vector.shape_cast %103 : vector<1x1x8x256xf32> to vector<1x8x256xf32>
    %105 = vector.extract_strided_slice %14 {offsets = [0, 3, 0, 0], sizes = [1, 1, 8, 256], strides = [1, 1, 1, 1]} : vector<1x4x8x256xf32> to vector<1x1x8x256xf32>
    %106 = vector.shape_cast %105 : vector<1x1x8x256xf32> to vector<1x8x256xf32>
    %107 = arith.mulf %104, %106 : vector<1x8x256xf32>
    %108 = vector.extract_strided_slice %16 {offsets = [0, 2, 0, 0], sizes = [1, 1, 8, 256], strides = [1, 1, 1, 1]} : vector<1x4x8x256xf32> to vector<1x1x8x256xf32>
    %109 = vector.shape_cast %108 : vector<1x1x8x256xf32> to vector<1x8x256xf32>
    %110 = vector.extract_strided_slice %16 {offsets = [0, 3, 0, 0], sizes = [1, 1, 8, 256], strides = [1, 1, 1, 1]} : vector<1x4x8x256xf32> to vector<1x1x8x256xf32>
    %111 = vector.shape_cast %110 : vector<1x1x8x256xf32> to vector<1x8x256xf32>
    %112 = arith.mulf %109, %111 : vector<1x8x256xf32>
    %113 = arith.addf %107, %112 : vector<1x8x256xf32>
    %114 = vector.extract_strided_slice %22 {offsets = [0, 2, 0, 0], sizes = [1, 1, 8, 256], strides = [1, 1, 1, 1]} : vector<1x4x8x256xf32> to vector<1x1x8x256xf32>
    %115 = vector.shape_cast %114 : vector<1x1x8x256xf32> to vector<1x8x256xf32>
    %116 = vector.extract_strided_slice %22 {offsets = [0, 3, 0, 0], sizes = [1, 1, 8, 256], strides = [1, 1, 1, 1]} : vector<1x4x8x256xf32> to vector<1x1x8x256xf32>
    %117 = vector.shape_cast %116 : vector<1x1x8x256xf32> to vector<1x8x256xf32>
    %118 = arith.mulf %115, %117 : vector<1x8x256xf32>
    %119 = tpu.reciprocal %118 {approx = true} : vector<1x8x256xf32> -> vector<1x8x256xf32>
    %120 = arith.mulf %113, %119 : vector<1x8x256xf32>
    %121 = vector.extract_strided_slice %14 {offsets = [0, 0, 0, 0], sizes = [1, 1, 8, 256], strides = [1, 1, 1, 1]} : vector<1x4x8x256xf32> to vector<1x1x8x256xf32>
    %122 = vector.shape_cast %121 : vector<1x1x8x256xf32> to vector<1x8x256xf32>
    %123 = vector.extract_strided_slice %14 {offsets = [0, 3, 0, 0], sizes = [1, 1, 8, 256], strides = [1, 1, 1, 1]} : vector<1x4x8x256xf32> to vector<1x1x8x256xf32>
    %124 = vector.shape_cast %123 : vector<1x1x8x256xf32> to vector<1x8x256xf32>
    %125 = arith.mulf %122, %124 : vector<1x8x256xf32>
    %126 = vector.extract_strided_slice %16 {offsets = [0, 0, 0, 0], sizes = [1, 1, 8, 256], strides = [1, 1, 1, 1]} : vector<1x4x8x256xf32> to vector<1x1x8x256xf32>
    %127 = vector.shape_cast %126 : vector<1x1x8x256xf32> to vector<1x8x256xf32>
    %128 = vector.extract_strided_slice %16 {offsets = [0, 3, 0, 0], sizes = [1, 1, 8, 256], strides = [1, 1, 1, 1]} : vector<1x4x8x256xf32> to vector<1x1x8x256xf32>
    %129 = vector.shape_cast %128 : vector<1x1x8x256xf32> to vector<1x8x256xf32>
    %130 = arith.mulf %127, %129 : vector<1x8x256xf32>
    %131 = arith.addf %125, %130 : vector<1x8x256xf32>
    %132 = vector.extract_strided_slice %22 {offsets = [0, 0, 0, 0], sizes = [1, 1, 8, 256], strides = [1, 1, 1, 1]} : vector<1x4x8x256xf32> to vector<1x1x8x256xf32>
    %133 = vector.shape_cast %132 : vector<1x1x8x256xf32> to vector<1x8x256xf32>
    %134 = vector.extract_strided_slice %22 {offsets = [0, 3, 0, 0], sizes = [1, 1, 8, 256], strides = [1, 1, 1, 1]} : vector<1x4x8x256xf32> to vector<1x1x8x256xf32>
    %135 = vector.shape_cast %134 : vector<1x1x8x256xf32> to vector<1x8x256xf32>
    %136 = arith.mulf %133, %135 : vector<1x8x256xf32>
    %137 = tpu.reciprocal %136 {approx = true} : vector<1x8x256xf32> -> vector<1x8x256xf32>
    %138 = arith.mulf %131, %137 : vector<1x8x256xf32>
    %139 = vector.shape_cast %66 : vector<1x8x256xf32> to vector<1x1x8x256xf32>
    %140 = vector.shape_cast %84 : vector<1x8x256xf32> to vector<1x1x8x256xf32>
    %141 = vector.shape_cast %102 : vector<1x8x256xf32> to vector<1x1x8x256xf32>
    %142 = vector.shape_cast %120 : vector<1x8x256xf32> to vector<1x1x8x256xf32>
    %143 = vector.shape_cast %138 : vector<1x8x256xf32> to vector<1x1x8x256xf32>
    %144 = tpu.concatenate %139, %140, %141, %142, %143 in 1 : vector<1x1x8x256xf32>, vector<1x1x8x256xf32>, vector<1x1x8x256xf32>, vector<1x1x8x256xf32>, vector<1x1x8x256xf32> -> vector<1x5x8x256xf32>
    %c0_30 = arith.constant 0 : index
    %c0_31 = arith.constant 0 : index
    %c0_32 = arith.constant 0 : index
    %c0_33 = arith.constant 0 : index
    %145 = vector.load %arg5[%c0_30, %c0_31, %c0_32, %c0_33] : memref<1x5x8x256xf32, #tpu.memory_space<vmem>>, vector<1x5x8x256xf32>
    tpu.vector_store %arg5[%c0_30, %c0_31, %c0_32, %c0_33], %144 {strides = array<i32>} : memref<1x5x8x256xf32, #tpu.memory_space<vmem>>, vector<1x5x8x256xf32>,
    return
  }
  func.func @transform_0(%arg0: i32) -> (i32, i32, i32, i32) {
    %c0_i32 = arith.constant 0 : i32
    %c0_i32_0 = arith.constant 0 : i32
    %c0_i32_1 = arith.constant 0 : i32
    %c0_i32_2 = arith.constant 0 : i32
    return %arg0, %c0_i32, %c0_i32_0, %c0_i32_1 : i32, i32, i32, i32
  }
  func.func @transform_1(%arg0: i32) -> (i32, i32) {
    %c0_i32 = arith.constant 0 : i32
    %c0_i32_0 = arith.constant 0 : i32
    %c0_i32_1 = arith.constant 0 : i32
    return %c0_i32, %c0_i32_0 : i32, i32
  }
  func.func @transform_2(%arg0: i32) -> (i32, i32) {
    %c0_i32 = arith.constant 0 : i32
    %c0_i32_0 = arith.constant 0 : i32
    %c0_i32_1 = arith.constant 0 : i32
    return %c0_i32, %c0_i32_0 : i32, i32
  }
  func.func @transform_3(%arg0: i32) -> (i32, i32) {
    %c0_i32 = arith.constant 0 : i32
    %c0_i32_0 = arith.constant 0 : i32
    %c0_i32_1 = arith.constant 0 : i32
    return %c0_i32, %c0_i32_0 : i32, i32
  }
  func.func @transform_4(%arg0: i32) -> (i32, i32, i32, i32) {
    %c0_i32 = arith.constant 0 : i32
    %c0_i32_0 = arith.constant 0 : i32
    %c0_i32_1 = arith.constant 0 : i32
    %c0_i32_2 = arith.constant 0 : i32
    return %arg0, %c0_i32, %c0_i32_0, %c0_i32_1 : i32, i32, i32, i32
  }
  func.func @transform_5(%arg0: i32) -> (i32, i32, i32, i32) {
    %c0_i32 = arith.constant 0 : i32
    %c0_i32_0 = arith.constant 0 : i32
    %c0_i32_1 = arith.constant 0 : i32
    %c0_i32_2 = arith.constant 0 : i32
    return %arg0, %c0_i32, %c0_i32_0, %c0_i32_1 : i32, i32, i32, i32
  }
  func.func @transform_6(%arg0: i32) -> (i32, i32, i32, i32) {
    %c0_i32 = arith.constant 0 : i32
    %c0_i32_0 = arith.constant 0 : i32
    %c0_i32_1 = arith.constant 0 : i32
    %c0_i32_2 = arith.constant 0 : i32
    return %arg0, %c0_i32, %c0_i32_0, %c0_i32_1 : i32, i32, i32, i32
  }
  func.func @transform_7(%arg0: i32) -> (i32, i32, i32, i32) {
    %c0_i32 = arith.constant 0 : i32
    %c0_i32_0 = arith.constant 0 : i32
    %c0_i32_1 = arith.constant 0 : i32
    %c0_i32_2 = arith.constant 0 : i32
    return %arg0, %c0_i32, %c0_i32_0, %c0_i32_1 : i32, i32, i32, i32
  }
}

</mosaic_0001>

<llo_original>
// kernel: df_computer_forward.1
$region0: #{df_computer_forward.1}
  #allocation0 [shape = 'u32[]', space=smem, size = 0x4, offset = 0x4, fixed_abs, tag = 'smem constant byte address 0x4 - core index']
  #allocation1 [shape = 'u32[144,128]{1,0:T(1,128)}', space=vmem, size = 0x12000, scoped, tag = 'internal scratch']
  %s0 = inlined_call_operand.vmem [shape: f32[2,4,9,128], index: 0, kind: input, shape index: {}]
  %s1 = inlined_call_operand.hbm [shape: bf16[768,512], index: 1, kind: input, shape index: {}]
  %s2 = inlined_call_operand.vmem [shape: f32[1,256], index: 2, kind: input, shape index: {}]
  %s3 = inlined_call_operand.vmem [shape: f32[1,256], index: 3, kind: input, shape index: {}]
  %s4 = inlined_call_operand.vmem [shape: f32[2,5,8,256], index: 4, kind: output, shape index: {0}]
  %s5 = inlined_call_operand.vmem [shape: f32[2,4,8,256], index: 5, kind: output, shape index: {1}]
  %s6 = inlined_call_operand.vmem [shape: f32[2,4,8,256], index: 6, kind: output, shape index: {2}]
  %s7 = inlined_call_operand.vmem [shape: f32[2,4,8,256], index: 7, kind: output, shape index: {3}]
  %8 = xla_tuple %s4, %s5, %s6, %s7
  %s9 = sld [smem:[#allocation0]]
  $region77: #{df_computer_forward.1} parent=0
    _
  %s11 = ssub.s32 1, %s9
  %s12 = scalar_select 0, %s11, %s9
  $region1: #{df_computer_forward.1} parent=0
    #allocation2 [shape = 'u8[786432]{0}', space=vmem, size = 0xc0000, scoped, tag = 'input window, operand 1, single buffered']
    #allocation3 [shape = 's32[2]{0}', space=sflag, size = 0x8, scoped, tag = 'scoped memory for df_computer_forward.1']
    %13 = vsyncpa [#allocation3], 0
    loop: start=0, step=1, limit=4
    $region2: #{df_computer_forward.1} parent=1 // loop_pre_header
      _
    $region3: #{df_computer_forward.1} parent=1 // loop_header
      %s15 = sphi 0, %s19
      %p16 = scmp.ge.s32.totalorder %s15, 4
      %s25 = sphi 0, %s27
      %s28 = sphi 0, %s25
      %s29 = sphi 0, %s28
      %s45 = sphi 0, %s29
      %s49 = sphi 0, %s49
      %s51 = sphi 0, %s49
      %s52 = sphi 0, %s51
      %s66 = sphi 0, %s52
      %s70 = sphi 0, %s70
      %s72 = sphi 0, %s70
      %s73 = sphi 0, %s72
      %s87 = sphi 0, %s73
      %s91 = sphi 0, %s91
      %s93 = sphi 0, %s91
      %s94 = sphi 0, %s93
      %s108 = sphi 0, %s94
      %s114 = sphi 0, %s116
      %s117 = sphi 0, %s114
      %s118 = sphi 0, %s117
      %s134 = sphi 0, %s118
      %s140 = sphi 0, %s142
      %s143 = sphi 0, %s140
      %s144 = sphi 0, %s143
      %s160 = sphi 0, %s144
      %s166 = sphi 0, %s168
      %s169 = sphi 0, %s166
      %s170 = sphi 0, %s169
      %s186 = sphi 0, %s170
      %s192 = sphi 0, %s194
      %s195 = sphi 0, %s192
      %s196 = sphi 0, %s195
      %s212 = sphi 0, %s196
    $region4: #{df_computer_forward.1} parent=1 // loop_header_branch
      %18 = sbr.rel (%p16) target = $region8
    $region5: #{df_computer_forward.1} parent=1 // loop_body
      %s20 = ssub.s32 %s15, 1
      %s21 = ssub.s32 %s15, 2
      %s22 = sadd.s32 %s15, 1
      %s23 = ssub.s32 %s15, %s22
      %p24 = scmp.eq.s32.totalorder %s23, 0
      %s26 = sadd.s32 %s25, 1
      %s27 = scalar_select %p24, %s25, %s26
      %p30 = pneg %p24
      %p31 = scmp.eq.s32.totalorder %s15, 1
      %p32 = por %p30, %p31
      %p33 = scmp.ne.s32.totalorder %s25, %s28
      %p34 = scmp.eq.s32.totalorder %s15, 0
      %p35 = por %p33, %p34
      %p36 = scmp.ne.s32.totalorder %s25, %s28
      %p37 = scmp.eq.s32.totalorder %s20, 1
      %p38 = por %p36, %p37
      %p39 = scmp.ne.s32.totalorder %s28, %s29
      %p40 = scmp.eq.s32.totalorder %s20, 0
      %p41 = por %p39, %p40
      %p42 = scmp.ne.s32.totalorder %s28, %s29
      %p43 = scmp.eq.s32.totalorder %s21, 1
      %p44 = por %p42, %p43
      %p46 = scmp.ne.s32.totalorder %s29, %s45
      %p47 = scmp.eq.s32.totalorder %s21, 0
      %p48 = por %p46, %p47
      %s50 = sadd.s32 %s49, 1
      %p53 = scmp.eq.s32.totalorder %s15, 1
      %p54 = scmp.ne.s32.totalorder %s49, %s51
      %p55 = scmp.eq.s32.totalorder %s15, 0
      %p56 = por %p54, %p55
      %p57 = scmp.ne.s32.totalorder %s49, %s51
      %p58 = scmp.eq.s32.totalorder %s20, 1
      %p59 = por %p57, %p58
      %p60 = scmp.ne.s32.totalorder %s51, %s52
      %p61 = scmp.eq.s32.totalorder %s20, 0
      %p62 = por %p60, %p61
      %p63 = scmp.ne.s32.totalorder %s51, %s52
      %p64 = scmp.eq.s32.totalorder %s21, 1
      %p65 = por %p63, %p64
      %p67 = scmp.ne.s32.totalorder %s52, %s66
      %p68 = scmp.eq.s32.totalorder %s21, 0
      %p69 = por %p67, %p68
      %s71 = sadd.s32 %s70, 1
      %p74 = scmp.eq.s32.totalorder %s15, 1
      %p75 = scmp.ne.s32.totalorder %s70, %s72
      %p76 = scmp.eq.s32.totalorder %s15, 0
      %p77 = por %p75, %p76
      %p78 = scmp.ne.s32.totalorder %s70, %s72
      %p79 = scmp.eq.s32.totalorder %s20, 1
      %p80 = por %p78, %p79
      %p81 = scmp.ne.s32.totalorder %s72, %s73
      %p82 = scmp.eq.s32.totalorder %s20, 0
      %p83 = por %p81, %p82
      %p84 = scmp.ne.s32.totalorder %s72, %s73
      %p85 = scmp.eq.s32.totalorder %s21, 1
      %p86 = por %p84, %p85
      %p88 = scmp.ne.s32.totalorder %s73, %s87
      %p89 = scmp.eq.s32.totalorder %s21, 0
      %p90 = por %p88, %p89
      %s92 = sadd.s32 %s91, 1
      %p95 = scmp.eq.s32.totalorder %s15, 1
      %p96 = scmp.ne.s32.totalorder %s91, %s93
      %p97 = scmp.eq.s32.totalorder %s15, 0
      %p98 = por %p96, %p97
      %p99 = scmp.ne.s32.totalorder %s91, %s93
      %p100 = scmp.eq.s32.totalorder %s20, 1
      %p101 = por %p99, %p100
      %p102 = scmp.ne.s32.totalorder %s93, %s94
      %p103 = scmp.eq.s32.totalorder %s20, 0
      %p104 = por %p102, %p103
      %p105 = scmp.ne.s32.totalorder %s93, %s94
      %p106 = scmp.eq.s32.totalorder %s21, 1
      %p107 = por %p105, %p106
      %p109 = scmp.ne.s32.totalorder %s94, %s108
      %p110 = scmp.eq.s32.totalorder %s21, 0
      %p111 = por %p109, %p110
      %s112 = ssub.s32 %s15, %s22
      %p113 = scmp.eq.s32.totalorder %s112, 0
      %s115 = sadd.s32 %s114, 1
      %s116 = scalar_select %p113, %s114, %s115
      %p119 = pneg %p113
      %p120 = scmp.eq.s32.totalorder %s15, 1
      %p121 = por %p119, %p120
      %p122 = scmp.ne.s32.totalorder %s114, %s117
      %p123 = scmp.eq.s32.totalorder %s15, 0
      %p124 = por %p122, %p123
      %p125 = scmp.ne.s32.totalorder %s114, %s117
      %p126 = scmp.eq.s32.totalorder %s20, 1
      %p127 = por %p125, %p126
      %p128 = scmp.ne.s32.totalorder %s117, %s118
      %p129 = scmp.eq.s32.totalorder %s20, 0
      %p130 = por %p128, %p129
      %p131 = scmp.ne.s32.totalorder %s117, %s118
      %p132 = scmp.eq.s32.totalorder %s21, 1
      %p133 = por %p131, %p132
      %p135 = scmp.ne.s32.totalorder %s118, %s134
      %p136 = scmp.eq.s32.totalorder %s21, 0
      %p137 = por %p135, %p136
      %s138 = ssub.s32 %s15, %s22
      %p139 = scmp.eq.s32.totalorder %s138, 0
      %s141 = sadd.s32 %s140, 1
      %s142 = scalar_select %p139, %s140, %s141
      %p145 = pneg %p139
      %p146 = scmp.eq.s32.totalorder %s15, 1
      %p147 = por %p145, %p146
      %p148 = scmp.ne.s32.totalorder %s140, %s143
      %p149 = scmp.eq.s32.totalorder %s15, 0
      %p150 = por %p148, %p149
      %p151 = scmp.ne.s32.totalorder %s140, %s143
      %p152 = scmp.eq.s32.totalorder %s20, 1
      %p153 = por %p151, %p152
      %p154 = scmp.ne.s32.totalorder %s143, %s144
      %p155 = scmp.eq.s32.totalorder %s20, 0
      %p156 = por %p154, %p155
      %p157 = scmp.ne.s32.totalorder %s143, %s144
      %p158 = scmp.eq.s32.totalorder %s21, 1
      %p159 = por %p157, %p158
      %p161 = scmp.ne.s32.totalorder %s144, %s160
      %p162 = scmp.eq.s32.totalorder %s21, 0
      %p163 = por %p161, %p162
      %s164 = ssub.s32 %s15, %s22
      %p165 = scmp.eq.s32.totalorder %s164, 0
      %s167 = sadd.s32 %s166, 1
      %s168 = scalar_select %p165, %s166, %s167
      %p171 = pneg %p165
      %p172 = scmp.eq.s32.totalorder %s15, 1
      %p173 = por %p171, %p172
      %p174 = scmp.ne.s32.totalorder %s166, %s169
      %p175 = scmp.eq.s32.totalorder %s15, 0
      %p176 = por %p174, %p175
      %p177 = scmp.ne.s32.totalorder %s166, %s169
      %p178 = scmp.eq.s32.totalorder %s20, 1
      %p179 = por %p177, %p178
      %p180 = scmp.ne.s32.totalorder %s169, %s170
      %p181 = scmp.eq.s32.totalorder %s20, 0
      %p182 = por %p180, %p181
      %p183 = scmp.ne.s32.totalorder %s169, %s170
      %p184 = scmp.eq.s32.totalorder %s21, 1
      %p185 = por %p183, %p184
      %p187 = scmp.ne.s32.totalorder %s170, %s186
      %p188 = scmp.eq.s32.totalorder %s21, 0
      %p189 = por %p187, %p188
      %s190 = ssub.s32 %s15, %s22
      %p191 = scmp.eq.s32.totalorder %s190, 0
      %s193 = sadd.s32 %s192, 1
      %s194 = scalar_select %p191, %s192, %s193
      %p197 = pneg %p191
      %p198 = scmp.eq.s32.totalorder %s15, 1
      %p199 = por %p197, %p198
      %p200 = scmp.ne.s32.totalorder %s192, %s195
      %p201 = scmp.eq.s32.totalorder %s15, 0
      %p202 = por %p200, %p201
      %p203 = scmp.ne.s32.totalorder %s192, %s195
      %p204 = scmp.eq.s32.totalorder %s20, 1
      %p205 = por %p203, %p204
      %p206 = scmp.ne.s32.totalorder %s195, %s196
      %p207 = scmp.eq.s32.totalorder %s20, 0
      %p208 = por %p206, %p207
      %p209 = scmp.ne.s32.totalorder %s195, %s196
      %p210 = scmp.eq.s32.totalorder %s21, 1
      %p211 = por %p209, %p210
      %p213 = scmp.ne.s32.totalorder %s196, %s212
      %p214 = scmp.eq.s32.totalorder %s21, 0
      %p215 = por %p213, %p214
      %p216 = scmp.le.s32.totalorder 1, %s15
      %p217 = scmp.lt.s32.totalorder %s15, 3
      %p218 = pnand %p216, %p217
      %p219 = pneg %p218
      // Predicated region
      $region9: #{df_computer_forward.1} parent=5 // pred_check
        _
      $region10: #{df_computer_forward.1} parent=5 // pred_check_branch
        %221 = sbr.rel (%p218) target = $region12
      $region11: #{df_computer_forward.1} parent=5 // pred_region
        %s222 = ssub.s32 %s15, 1
        // Predicated region
        $region13: #{df_computer_forward.1} parent=11 // pred_check
          %p223 = pneg %p62
        $region14: #{df_computer_forward.1} parent=11 // pred_check_branch
          %225 = sbr.rel (%p223) target = $region16
        $region15: #{df_computer_forward.1} parent=11 // pred_region
          %s227 = ssub.s32 24576, 24576
          %228 = vsyncadd [#allocation3], %s227
          %s229 = sshll.u32 [#allocation2], 4
          %s230 = int_to_ptr.vmem [resolvable:$true] %s229
          %235 = dma.hbm_to_vmem [thread:$0]  %s1, 24576, %s230, [#allocation3], 256, 256, 16
        $region16: #{df_computer_forward.1} parent=11 // pred_fallthru
          _
        // Predicated region
        $region17: #{df_computer_forward.1} parent=11 // pred_check
          %p236 = pneg %p83
        $region18: #{df_computer_forward.1} parent=11 // pred_check_branch
          %238 = sbr.rel (%p236) target = $region20
        $region19: #{df_computer_forward.1} parent=11 // pred_region
          _
        $region20: #{df_computer_forward.1} parent=11 // pred_fallthru
          _
        // Predicated region
        $region21: #{df_computer_forward.1} parent=11 // pred_check
          %p239 = pneg %p104
        $region22: #{df_computer_forward.1} parent=11 // pred_check_branch
          %241 = sbr.rel (%p239) target = $region24
        $region23: #{df_computer_forward.1} parent=11 // pred_region
          _
        $region24: #{df_computer_forward.1} parent=11 // pred_fallthru
          _
      $region12: #{df_computer_forward.1} parent=5 // pred_fallthru
        _
      %p242 = scmp.lt.s32.totalorder %s15, 2
      // Predicated region
      $region25: #{df_computer_forward.1} parent=5 // pred_check
        %p243 = pneg %p242
      $region26: #{df_computer_forward.1} parent=5 // pred_check_branch
        %245 = sbr.rel (%p243) target = $region28
      $region27: #{df_computer_forward.1} parent=5 // pred_region
        // Predicated region
        $region29: #{df_computer_forward.1} parent=27 // pred_check
          %p246 = pneg %p35
        $region30: #{df_computer_forward.1} parent=27 // pred_check_branch
          %248 = sbr.rel (%p246) target = $region32
        $region31: #{df_computer_forward.1} parent=27 // pred_region
          %p249 = scmp.lt.s32.totalorder %s15, 1
          %s250 = scalar_select %p249, %s15, 1
          %s251 = smul.addr %s250, 8
          %s252 = smul.addr %s251, 8
          %s253 = scalar_lea.vmem %s0, %s252
        $region32: #{df_computer_forward.1} parent=27 // pred_fallthru
          _
      $region28: #{df_computer_forward.1} parent=5 // pred_fallthru
        _
      %p254 = scmp.le.s32.totalorder 1, %s15
      %p255 = scmp.lt.s32.totalorder %s15, 3
      %p256 = pnand %p254, %p255
      %p257 = pneg %p256
      // Predicated region
      $region33: #{df_computer_forward.1} parent=5 // pred_check
        _
      $region34: #{df_computer_forward.1} parent=5 // pred_check_branch
        %259 = sbr.rel (%p256) target = $region36
      $region35: #{df_computer_forward.1} parent=5 // pred_region
        %s260 = ssub.s32 %s15, 1
        // Predicated region
        $region37: #{df_computer_forward.1} parent=35 // pred_check
          %p261 = pneg %p62
        $region38: #{df_computer_forward.1} parent=35 // pred_check_branch
          %263 = sbr.rel (%p261) target = $region40
        $region39: #{df_computer_forward.1} parent=35 // pred_region
          %264 = dma.done [#allocation3], 24576
        $region40: #{df_computer_forward.1} parent=35 // pred_fallthru
          _
        %p265 = scmp.lt.s32.totalorder %s20, 1
        %s266 = scalar_select %p265, %s20, 1
        %s267 = smul.addr %s266, 8
        %s268 = smul.addr %s267, 8
        %s269 = scalar_lea.vmem %s0, %s268
        %p270 = pneg %p41
        %p271 = pneg %p38
        %p272 = pneg %p62
        %p273 = pneg %p59
        %p274 = pneg %p83
        %p275 = pneg %p80
        %p276 = pneg %p104
        %p277 = pneg %p101
        %p278 = pneg %p130
        %p279 = pneg %p127
        %p280 = scmp.lt.s32.totalorder %s20, 1
        %s281 = scalar_select %p280, %s20, 1
        %s282 = smul.addr %s281, 10
        %s283 = smul.addr %s282, 8
        %s284 = scalar_lea.vmem %s4, %s283
        %p285 = pneg %p156
        %p286 = pneg %p153
        %p287 = scmp.lt.s32.totalorder %s20, 1
        %s288 = scalar_select %p287, %s20, 1
        %s289 = smul.addr %s288, 8
        %s290 = smul.addr %s289, 8
        %s291 = scalar_lea.vmem %s5, %s290
        %p292 = pneg %p182
        %p293 = pneg %p179
        %p294 = scmp.lt.s32.totalorder %s20, 1
        %s295 = scalar_select %p294, %s20, 1
        %s296 = smul.addr %s295, 8
        %s297 = smul.addr %s296, 8
        %s298 = scalar_lea.vmem %s6, %s297
        %p299 = pneg %p208
        %p300 = pneg %p205
        %p301 = scmp.lt.s32.totalorder %s20, 1
        %s302 = scalar_select %p301, %s20, 1
        %s303 = smul.addr %s302, 8
        %s304 = smul.addr %s303, 8
        %s305 = scalar_lea.vmem %s7, %s304
        %p306 = scmp.lt.s32.totalorder %s20, 1
        %s307 = scalar_select %p306, %s20, 1
        %s308 = smul.addr %s307, 8
        %s309 = smul.addr %s308, 8
        %s310 = scalar_lea.vmem %s0, %s309
        %p311 = scmp.lt.s32.totalorder %s20, 1
        %s312 = scalar_select %p311, %s20, 1
        %s313 = smul.addr %s312, 10
        %s314 = smul.addr %s313, 8
        %s315 = scalar_lea.vmem %s4, %s314
        %p316 = scmp.lt.s32.totalorder %s20, 1
        %s317 = scalar_select %p316, %s20, 1
        %s318 = smul.addr %s317, 8
        %s319 = smul.addr %s318, 8
        %s320 = scalar_lea.vmem %s5, %s319
        %p321 = scmp.lt.s32.totalorder %s20, 1
        %s322 = scalar_select %p321, %s20, 1
        %s323 = smul.addr %s322, 8
        %s324 = smul.addr %s323, 8
        %s325 = scalar_lea.vmem %s6, %s324
        %p326 = scmp.lt.s32.totalorder %s20, 1
        %s327 = scalar_select %p326, %s20, 1
        %s328 = smul.addr %s327, 8
        %s329 = smul.addr %s328, 8
        %s330 = scalar_lea.vmem %s7, %s329
        %v331 = vld [vmem:[%s310] sm:$0xff]
        %v332 = vld [vmem:[%s310 + $0x8] sm:$0x1]
        %v333 = vld [vmem:[%s310 + $0x10] sm:$0xff]
        %v334 = vld [vmem:[%s310 + $0x18] sm:$0x1]
        %v335 = vld [vmem:[%s310 + $0x20] sm:$0xff]
        %v336 = vld [vmem:[%s310 + $0x28] sm:$0x1]
        %v337 = vld [vmem:[%s310 + $0x30] sm:$0xff]
        %v338 = vld [vmem:[%s310 + $0x38] sm:$0x1]
        %vm347 = vcmask 1046528
        %v348 = vrot.slane %v331, 1
        %v349 = vrot.slane %v332, 1
        %v350 = vsel %vm347, %v348, %v349
        %v351 = vrot.slane %v333, 1
        %v352 = vrot.slane %v334, 1
        %v353 = vsel %vm347, %v351, %v352
        %v354 = vrot.slane %v335, 1
        %v355 = vrot.slane %v336, 1
        %v356 = vsel %vm347, %v354, %v355
        %v357 = vrot.slane %v337, 1
        %v358 = vrot.slane %v338, 1
        %v359 = vsel %vm347, %v357, %v358
        %v364 = vpack.c.bf16 %v333, %v331
        %v365 = vpack.c.bf16 %v353, %v350
        %v366 = vpack.c.bf16 %v337, %v335
        %v367 = vpack.c.bf16 %v359, %v356
        %v368 = vunpack.c.l.bf16 %v364
        %v369 = vunpack.c.l.bf16 %v365
        %v370 = vunpack.c.h.bf16 %v364
        %v371 = vunpack.c.h.bf16 %v365
        %v372 = vunpack.c.l.bf16 %v366
        %v373 = vunpack.c.l.bf16 %v367
        %v374 = vunpack.c.h.bf16 %v366
        %v375 = vunpack.c.h.bf16 %v367
        %v376 = vsub.f32 %v331, %v368
        %v377 = vsub.f32 %v350, %v369
        %v378 = vsub.f32 %v333, %v370
        %v379 = vsub.f32 %v353, %v371
        %v380 = vsub.f32 %v335, %v372
        %v381 = vsub.f32 %v356, %v373
        %v382 = vsub.f32 %v337, %v374
        %v383 = vsub.f32 %v359, %v375
        %v384 = vpack.c.bf16 %v378, %v376
        %v385 = vpack.c.bf16 %v379, %v377
        %v386 = vpack.c.bf16 %v382, %v380
        %v387 = vpack.c.bf16 %v383, %v381
        %v388 = vld [vmem:[#allocation2] sm:$0xff]
        %v389 = vld [vmem:[#allocation2 + $0x8] sm:$0xff]
        %v390 = vld [vmem:[#allocation2 + $0x10] sm:$0xff]
        %v391 = vld [vmem:[#allocation2 + $0x18] sm:$0xff]
        %v392 = vld [vmem:[#allocation2 + $0x20] sm:$0xff]
        %v393 = vld [vmem:[#allocation2 + $0x28] sm:$0xff]
        %v394 = vld [vmem:[#allocation2 + $0x30] sm:$0xff]
        %v395 = vld [vmem:[#allocation2 + $0x38] sm:$0xff]
        %v396 = vld [vmem:[#allocation2 + $0x40] sm:$0xff]
        %v397 = vld [vmem:[#allocation2 + $0x48] sm:$0xff]
        %v398 = vld [vmem:[#allocation2 + $0x50] sm:$0xff]
        %v399 = vld [vmem:[#allocation2 + $0x58] sm:$0xff]
        %v400 = vld [vmem:[#allocation2 + $0x60] sm:$0xff]
        %v401 = vld [vmem:[#allocation2 + $0x68] sm:$0xff]
        %v402 = vld [vmem:[#allocation2 + $0x70] sm:$0xff]
        %v403 = vld [vmem:[#allocation2 + $0x78] sm:$0xff]
        %v404 = vld [vmem:[#allocation2 + $0x80] sm:$0xff]
        %v405 = vld [vmem:[#allocation2 + $0x88] sm:$0xff]
        %v406 = vld [vmem:[#allocation2 + $0x90] sm:$0xff]
        %v407 = vld [vmem:[#allocation2 + $0x98] sm:$0xff]
        %v408 = vld [vmem:[#allocation2 + $0xa0] sm:$0xff]
        %v409 = vld [vmem:[#allocation2 + $0xa8] sm:$0xff]
        %v410 = vld [vmem:[#allocation2 + $0xb0] sm:$0xff]
        %v411 = vld [vmem:[#allocation2 + $0xb8] sm:$0xff]
        %v412 = vld [vmem:[#allocation2 + $0xc0] sm:$0xff]
        %v413 = vld [vmem:[#allocation2 + $0xc8] sm:$0xff]
        %v414 = vld [vmem:[#allocation2 + $0xd0] sm:$0xff]
        %v415 = vld [vmem:[#allocation2 + $0xd8] sm:$0xff]
        %v416 = vld [vmem:[#allocation2 + $0xe0] sm:$0xff]
        %v417 = vld [vmem:[#allocation2 + $0xe8] sm:$0xff]
        %v418 = vld [vmem:[#allocation2 + $0xf0] sm:$0xff]
        %v419 = vld [vmem:[#allocation2 + $0xf8] sm:$0xff]
        %v420 = vld [vmem:[#allocation2 + $0x100] sm:$0xff]
        %v421 = vld [vmem:[#allocation2 + $0x108] sm:$0xff]
        %v422 = vld [vmem:[#allocation2 + $0x110] sm:$0xff]
        %v423 = vld [vmem:[#allocation2 + $0x118] sm:$0xff]
        %v424 = vld [vmem:[#allocation2 + $0x120] sm:$0xff]
        %v425 = vld [vmem:[#allocation2 + $0x128] sm:$0xff]
        %v426 = vld [vmem:[#allocation2 + $0x130] sm:$0xff]
        %v427 = vld [vmem:[#allocation2 + $0x138] sm:$0xff]
        %v428 = vld [vmem:[#allocation2 + $0x140] sm:$0xff]
        %v429 = vld [vmem:[#allocation2 + $0x148] sm:$0xff]
        %v430 = vld [vmem:[#allocation2 + $0x150] sm:$0xff]
        %v431 = vld [vmem:[#allocation2 + $0x158] sm:$0xff]
        %v432 = vld [vmem:[#allocation2 + $0x160] sm:$0xff]
        %v433 = vld [vmem:[#allocation2 + $0x168] sm:$0xff]
        %v434 = vld [vmem:[#allocation2 + $0x170] sm:$0xff]
        %v435 = vld [vmem:[#allocation2 + $0x178] sm:$0xff]
        %v436 = vld [vmem:[#allocation2 + $0x180] sm:$0xff]
        %v437 = vld [vmem:[#allocation2 + $0x188] sm:$0xff]
        %v438 = vld [vmem:[#allocation2 + $0x190] sm:$0xff]
        %v439 = vld [vmem:[#allocation2 + $0x198] sm:$0xff]
        %v440 = vld [vmem:[#allocation2 + $0x1a0] sm:$0xff]
        %v441 = vld [vmem:[#allocation2 + $0x1a8] sm:$0xff]
        %v442 = vld [vmem:[#allocation2 + $0x1b0] sm:$0xff]
        %v443 = vld [vmem:[#allocation2 + $0x1b8] sm:$0xff]
        %v444 = vld [vmem:[#allocation2 + $0x1c0] sm:$0xff]
        %v445 = vld [vmem:[#allocation2 + $0x1c8] sm:$0xff]
        %v446 = vld [vmem:[#allocation2 + $0x1d0] sm:$0xff]
        %v447 = vld [vmem:[#allocation2 + $0x1d8] sm:$0xff]
        %v448 = vld [vmem:[#allocation2 + $0x1e0] sm:$0xff]
        %v449 = vld [vmem:[#allocation2 + $0x1e8] sm:$0xff]
        %v450 = vld [vmem:[#allocation2 + $0x1f0] sm:$0xff]
        %v451 = vld [vmem:[#allocation2 + $0x1f8] sm:$0xff]
        %v452 = vld [vmem:[#allocation2 + $0x200] sm:$0xff]
        %v453 = vld [vmem:[#allocation2 + $0x208] sm:$0xff]
        %v454 = vld [vmem:[#allocation2 + $0x210] sm:$0xff]
        %v455 = vld [vmem:[#allocation2 + $0x218] sm:$0xff]
        %v456 = vld [vmem:[#allocation2 + $0x220] sm:$0xff]
        %v457 = vld [vmem:[#allocation2 + $0x228] sm:$0xff]
        %v458 = vld [vmem:[#allocation2 + $0x230] sm:$0xff]
        %v459 = vld [vmem:[#allocation2 + $0x238] sm:$0xff]
        %v460 = vld [vmem:[#allocation2 + $0x240] sm:$0xff]
        %v461 = vld [vmem:[#allocation2 + $0x248] sm:$0xff]
        %v462 = vld [vmem:[#allocation2 + $0x250] sm:$0xff]
        %v463 = vld [vmem:[#allocation2 + $0x258] sm:$0xff]
        %v464 = vld [vmem:[#allocation2 + $0x260] sm:$0xff]
        %v465 = vld [vmem:[#allocation2 + $0x268] sm:$0xff]
        %v466 = vld [vmem:[#allocation2 + $0x270] sm:$0xff]
        %v467 = vld [vmem:[#allocation2 + $0x278] sm:$0xff]
        %v468 = vld [vmem:[#allocation2 + $0x280] sm:$0xff]
        %v469 = vld [vmem:[#allocation2 + $0x288] sm:$0xff]
        %v470 = vld [vmem:[#allocation2 + $0x290] sm:$0xff]
        %v471 = vld [vmem:[#allocation2 + $0x298] sm:$0xff]
        %v472 = vld [vmem:[#allocation2 + $0x2a0] sm:$0xff]
        %v473 = vld [vmem:[#allocation2 + $0x2a8] sm:$0xff]
        %v474 = vld [vmem:[#allocation2 + $0x2b0] sm:$0xff]
        %v475 = vld [vmem:[#allocation2 + $0x2b8] sm:$0xff]
        %v476 = vld [vmem:[#allocation2 + $0x2c0] sm:$0xff]
        %v477 = vld [vmem:[#allocation2 + $0x2c8] sm:$0xff]
        %v478 = vld [vmem:[#allocation2 + $0x2d0] sm:$0xff]
        %v479 = vld [vmem:[#allocation2 + $0x2d8] sm:$0xff]
        %v480 = vld [vmem:[#allocation2 + $0x2e0] sm:$0xff]
        %v481 = vld [vmem:[#allocation2 + $0x2e8] sm:$0xff]
        %v482 = vld [vmem:[#allocation2 + $0x2f0] sm:$0xff]
        %v483 = vld [vmem:[#allocation2 + $0x2f8] sm:$0xff]
        %v484 = vld [vmem:[#allocation2 + $0x300] sm:$0xff]
        %v485 = vld [vmem:[#allocation2 + $0x308] sm:$0xff]
        %v486 = vld [vmem:[#allocation2 + $0x310] sm:$0xff]
        %v487 = vld [vmem:[#allocation2 + $0x318] sm:$0xff]
        %v488 = vld [vmem:[#allocation2 + $0x320] sm:$0xff]
        %v489 = vld [vmem:[#allocation2 + $0x328] sm:$0xff]
        %v490 = vld [vmem:[#allocation2 + $0x330] sm:$0xff]
        %v491 = vld [vmem:[#allocation2 + $0x338] sm:$0xff]
        %v492 = vld [vmem:[#allocation2 + $0x340] sm:$0xff]
        %v493 = vld [vmem:[#allocation2 + $0x348] sm:$0xff]
        %v494 = vld [vmem:[#allocation2 + $0x350] sm:$0xff]
        %v495 = vld [vmem:[#allocation2 + $0x358] sm:$0xff]
        %v496 = vld [vmem:[#allocation2 + $0x360] sm:$0xff]
        %v497 = vld [vmem:[#allocation2 + $0x368] sm:$0xff]
        %v498 = vld [vmem:[#allocation2 + $0x370] sm:$0xff]
        %v499 = vld [vmem:[#allocation2 + $0x378] sm:$0xff]
        %v500 = vld [vmem:[#allocation2 + $0x380] sm:$0xff]
        %v501 = vld [vmem:[#allocation2 + $0x388] sm:$0xff]
        %v502 = vld [vmem:[#allocation2 + $0x390] sm:$0xff]
        %v503 = vld [vmem:[#allocation2 + $0x398] sm:$0xff]
        %v504 = vld [vmem:[#allocation2 + $0x3a0] sm:$0xff]
        %v505 = vld [vmem:[#allocation2 + $0x3a8] sm:$0xff]
        %v506 = vld [vmem:[#allocation2 + $0x3b0] sm:$0xff]
        %v507 = vld [vmem:[#allocation2 + $0x3b8] sm:$0xff]
        %v508 = vld [vmem:[#allocation2 + $0x3c0] sm:$0xff]
        %v509 = vld [vmem:[#allocation2 + $0x3c8] sm:$0xff]
        %v510 = vld [vmem:[#allocation2 + $0x3d0] sm:$0xff]
        %v511 = vld [vmem:[#allocation2 + $0x3d8] sm:$0xff]
        %v512 = vld [vmem:[#allocation2 + $0x3e0] sm:$0xff]
        %v513 = vld [vmem:[#allocation2 + $0x3e8] sm:$0xff]
        %v514 = vld [vmem:[#allocation2 + $0x3f0] sm:$0xff]
        %v515 = vld [vmem:[#allocation2 + $0x3f8] sm:$0xff]
        %v516 = vld [vmem:[#allocation2 + $0x400] sm:$0xff]
        %v517 = vld [vmem:[#allocation2 + $0x408] sm:$0xff]
        %v518 = vld [vmem:[#allocation2 + $0x410] sm:$0xff]
        %v519 = vld [vmem:[#allocation2 + $0x418] sm:$0xff]
        %v520 = vld [vmem:[#allocation2 + $0x420] sm:$0xff]
        %v521 = vld [vmem:[#allocation2 + $0x428] sm:$0xff]
        %v522 = vld [vmem:[#allocation2 + $0x430] sm:$0xff]
        %v523 = vld [vmem:[#allocation2 + $0x438] sm:$0xff]
        %v524 = vld [vmem:[#allocation2 + $0x440] sm:$0xff]
        %v525 = vld [vmem:[#allocation2 + $0x448] sm:$0xff]
        %v526 = vld [vmem:[#allocation2 + $0x450] sm:$0xff]
        %v527 = vld [vmem:[#allocation2 + $0x458] sm:$0xff]
        %v528 = vld [vmem:[#allocation2 + $0x460] sm:$0xff]
        %v529 = vld [vmem:[#allocation2 + $0x468] sm:$0xff]
        %v530 = vld [vmem:[#allocation2 + $0x470] sm:$0xff]
        %v531 = vld [vmem:[#allocation2 + $0x478] sm:$0xff]
        %v532 = vld [vmem:[#allocation2 + $0x480] sm:$0xff]
        %v533 = vld [vmem:[#allocation2 + $0x488] sm:$0xff]
        %v534 = vld [vmem:[#allocation2 + $0x490] sm:$0xff]
        %v535 = vld [vmem:[#allocation2 + $0x498] sm:$0xff]
        %v536 = vld [vmem:[#allocation2 + $0x4a0] sm:$0xff]
        %v537 = vld [vmem:[#allocation2 + $0x4a8] sm:$0xff]
        %v538 = vld [vmem:[#allocation2 + $0x4b0] sm:$0xff]
        %v539 = vld [vmem:[#allocation2 + $0x4b8] sm:$0xff]
        %v540 = vld [vmem:[#allocation2 + $0x4c0] sm:$0xff]
        %v541 = vld [vmem:[#allocation2 + $0x4c8] sm:$0xff]
        %v542 = vld [vmem:[#allocation2 + $0x4d0] sm:$0xff]
        %v543 = vld [vmem:[#allocation2 + $0x4d8] sm:$0xff]
        %v544 = vld [vmem:[#allocation2 + $0x4e0] sm:$0xff]
        %v545 = vld [vmem:[#allocation2 + $0x4e8] sm:$0xff]
        %v546 = vld [vmem:[#allocation2 + $0x4f0] sm:$0xff]
        %v547 = vld [vmem:[#allocation2 + $0x4f8] sm:$0xff]
        %v548 = vld [vmem:[#allocation2 + $0x500] sm:$0xff]
        %v549 = vld [vmem:[#allocation2 + $0x508] sm:$0xff]
        %v550 = vld [vmem:[#allocation2 + $0x510] sm:$0xff]
        %v551 = vld [vmem:[#allocation2 + $0x518] sm:$0xff]
        %v552 = vld [vmem:[#allocation2 + $0x520] sm:$0xff]
        %v553 = vld [vmem:[#allocation2 + $0x528] sm:$0xff]
        %v554 = vld [vmem:[#allocation2 + $0x530] sm:$0xff]
        %v555 = vld [vmem:[#allocation2 + $0x538] sm:$0xff]
        %v556 = vld [vmem:[#allocation2 + $0x540] sm:$0xff]
        %v557 = vld [vmem:[#allocation2 + $0x548] sm:$0xff]
        %v558 = vld [vmem:[#allocation2 + $0x550] sm:$0xff]
        %v559 = vld [vmem:[#allocation2 + $0x558] sm:$0xff]
        %v560 = vld [vmem:[#allocation2 + $0x560] sm:$0xff]
        %v561 = vld [vmem:[#allocation2 + $0x568] sm:$0xff]
        %v562 = vld [vmem:[#allocation2 + $0x570] sm:$0xff]
        %v563 = vld [vmem:[#allocation2 + $0x578] sm:$0xff]
        %v564 = vld [vmem:[#allocation2 + $0x580] sm:$0xff]
        %v565 = vld [vmem:[#allocation2 + $0x588] sm:$0xff]
        %v566 = vld [vmem:[#allocation2 + $0x590] sm:$0xff]
        %v567 = vld [vmem:[#allocation2 + $0x598] sm:$0xff]
        %v568 = vld [vmem:[#allocation2 + $0x5a0] sm:$0xff]
        %v569 = vld [vmem:[#allocation2 + $0x5a8] sm:$0xff]
        %v570 = vld [vmem:[#allocation2 + $0x5b0] sm:$0xff]
        %v571 = vld [vmem:[#allocation2 + $0x5b8] sm:$0xff]
        %v572 = vld [vmem:[#allocation2 + $0x5c0] sm:$0xff]
        %v573 = vld [vmem:[#allocation2 + $0x5c8] sm:$0xff]
        %v574 = vld [vmem:[#allocation2 + $0x5d0] sm:$0xff]
        %v575 = vld [vmem:[#allocation2 + $0x5d8] sm:$0xff]
        %v576 = vld [vmem:[#allocation2 + $0x5e0] sm:$0xff]
        %v577 = vld [vmem:[#allocation2 + $0x5e8] sm:$0xff]
        %v578 = vld [vmem:[#allocation2 + $0x5f0] sm:$0xff]
        %v579 = vld [vmem:[#allocation2 + $0x5f8] sm:$0xff]
        %v772 = vunpack.c.l.b16 %v388
        %v773 = vunpack.c.h.b16 %v388
        %v774 = vunpack.c.l.b16 %v389
        %v775 = vunpack.c.h.b16 %v389
        %v776 = vunpack.c.l.b16 %v390
        %v777 = vunpack.c.h.b16 %v390
        %v778 = vunpack.c.l.b16 %v391
        %v779 = vunpack.c.h.b16 %v391
        %v780 = vunpack.c.l.b16 %v392
        %v781 = vunpack.c.h.b16 %v392
        %v782 = vunpack.c.l.b16 %v393
        %v783 = vunpack.c.h.b16 %v393
        %v784 = vunpack.c.l.b16 %v394
        %v785 = vunpack.c.h.b16 %v394
        %v786 = vunpack.c.l.b16 %v395
        %v787 = vunpack.c.h.b16 %v395
        %v788 = vunpack.c.l.b16 %v396
        %v789 = vunpack.c.h.b16 %v396
        %v790 = vunpack.c.l.b16 %v397
        %v791 = vunpack.c.h.b16 %v397
        %v792 = vunpack.c.l.b16 %v398
        %v793 = vunpack.c.h.b16 %v398
        %v794 = vunpack.c.l.b16 %v399
        %v795 = vunpack.c.h.b16 %v399
        %v796 = vunpack.c.l.b16 %v400
        %v797 = vunpack.c.h.b16 %v400
        %v798 = vunpack.c.l.b16 %v401
        %v799 = vunpack.c.h.b16 %v401
        %v800 = vunpack.c.l.b16 %v402
        %v801 = vunpack.c.h.b16 %v402
        %v802 = vunpack.c.l.b16 %v403
        %v803 = vunpack.c.h.b16 %v403
        %v804 = vunpack.c.l.b16 %v404
        %v805 = vunpack.c.h.b16 %v404
        %v806 = vunpack.c.l.b16 %v405
        %v807 = vunpack.c.h.b16 %v405
        %v808 = vunpack.c.l.b16 %v406
        %v809 = vunpack.c.h.b16 %v406
        %v810 = vunpack.c.l.b16 %v407
        %v811 = vunpack.c.h.b16 %v407
        %v812 = vunpack.c.l.b16 %v408
        %v813 = vunpack.c.h.b16 %v408
        %v814 = vunpack.c.l.b16 %v409
        %v815 = vunpack.c.h.b16 %v409
        %v816 = vunpack.c.l.b16 %v410
        %v817 = vunpack.c.h.b16 %v410
        %v818 = vunpack.c.l.b16 %v411
        %v819 = vunpack.c.h.b16 %v411
        %v820 = vunpack.c.l.b16 %v412
        %v821 = vunpack.c.h.b16 %v412
        %v822 = vunpack.c.l.b16 %v413
        %v823 = vunpack.c.h.b16 %v413
        %v824 = vunpack.c.l.b16 %v414
        %v825 = vunpack.c.h.b16 %v414
        %v826 = vunpack.c.l.b16 %v415
        %v827 = vunpack.c.h.b16 %v415
        %v828 = vunpack.c.l.b16 %v416
        %v829 = vunpack.c.h.b16 %v416
        %v830 = vunpack.c.l.b16 %v417
        %v831 = vunpack.c.h.b16 %v417
        %v832 = vunpack.c.l.b16 %v418
        %v833 = vunpack.c.h.b16 %v418
        %v834 = vunpack.c.l.b16 %v419
        %v835 = vunpack.c.h.b16 %v419
        %v836 = vunpack.c.l.b16 %v420
        %v837 = vunpack.c.h.b16 %v420
        %v838 = vunpack.c.l.b16 %v421
        %v839 = vunpack.c.h.b16 %v421
        %v840 = vunpack.c.l.b16 %v422
        %v841 = vunpack.c.h.b16 %v422
        %v842 = vunpack.c.l.b16 %v423
        %v843 = vunpack.c.h.b16 %v423
        %v844 = vunpack.c.l.b16 %v424
        %v845 = vunpack.c.h.b16 %v424
        %v846 = vunpack.c.l.b16 %v425
        %v847 = vunpack.c.h.b16 %v425
        %v848 = vunpack.c.l.b16 %v426
        %v849 = vunpack.c.h.b16 %v426
        %v850 = vunpack.c.l.b16 %v427
        %v851 = vunpack.c.h.b16 %v427
        %v852 = vunpack.c.l.b16 %v428
        %v853 = vunpack.c.h.b16 %v428
        %v854 = vunpack.c.l.b16 %v429
        %v855 = vunpack.c.h.b16 %v429
        %v856 = vunpack.c.l.b16 %v430
        %v857 = vunpack.c.h.b16 %v430
        %v858 = vunpack.c.l.b16 %v431
        %v859 = vunpack.c.h.b16 %v431
        %v860 = vunpack.c.l.b16 %v432
        %v861 = vunpack.c.h.b16 %v432
        %v862 = vunpack.c.l.b16 %v433
        %v863 = vunpack.c.h.b16 %v433
        %v864 = vunpack.c.l.b16 %v434
        %v865 = vunpack.c.h.b16 %v434
        %v866 = vunpack.c.l.b16 %v435
        %v867 = vunpack.c.h.b16 %v435
        %v868 = vunpack.c.l.b16 %v436
        %v869 = vunpack.c.h.b16 %v436
        %v870 = vunpack.c.l.b16 %v437
        %v871 = vunpack.c.h.b16 %v437
        %v872 = vunpack.c.l.b16 %v438
        %v873 = vunpack.c.h.b16 %v438
        %v874 = vunpack.c.l.b16 %v439
        %v875 = vunpack.c.h.b16 %v439
        %v876 = vunpack.c.l.b16 %v440
        %v877 = vunpack.c.h.b16 %v440
        %v878 = vunpack.c.l.b16 %v441
        %v879 = vunpack.c.h.b16 %v441
        %v880 = vunpack.c.l.b16 %v442
        %v881 = vunpack.c.h.b16 %v442
        %v882 = vunpack.c.l.b16 %v443
        %v883 = vunpack.c.h.b16 %v443
        %v884 = vunpack.c.l.b16 %v444
        %v885 = vunpack.c.h.b16 %v444
        %v886 = vunpack.c.l.b16 %v445
        %v887 = vunpack.c.h.b16 %v445
        %v888 = vunpack.c.l.b16 %v446
        %v889 = vunpack.c.h.b16 %v446
        %v890 = vunpack.c.l.b16 %v447
        %v891 = vunpack.c.h.b16 %v447
        %v892 = vunpack.c.l.b16 %v448
        %v893 = vunpack.c.h.b16 %v448
        %v894 = vunpack.c.l.b16 %v449
        %v895 = vunpack.c.h.b16 %v449
        %v896 = vunpack.c.l.b16 %v450
        %v897 = vunpack.c.h.b16 %v450
        %v898 = vunpack.c.l.b16 %v451
        %v899 = vunpack.c.h.b16 %v451
        %v900 = vunpack.c.l.b16 %v452
        %v901 = vunpack.c.h.b16 %v452
        %v902 = vunpack.c.l.b16 %v453
        %v903 = vunpack.c.h.b16 %v453
        %v904 = vunpack.c.l.b16 %v454
        %v905 = vunpack.c.h.b16 %v454
        %v906 = vunpack.c.l.b16 %v455
        %v907 = vunpack.c.h.b16 %v455
        %v908 = vunpack.c.l.b16 %v456
        %v909 = vunpack.c.h.b16 %v456
        %v910 = vunpack.c.l.b16 %v457
        %v911 = vunpack.c.h.b16 %v457
        %v912 = vunpack.c.l.b16 %v458
        %v913 = vunpack.c.h.b16 %v458
        %v914 = vunpack.c.l.b16 %v459
        %v915 = vunpack.c.h.b16 %v459
        %v916 = vunpack.c.l.b16 %v460
        %v917 = vunpack.c.h.b16 %v460
        %v918 = vunpack.c.l.b16 %v461
        %v919 = vunpack.c.h.b16 %v461
        %v920 = vunpack.c.l.b16 %v462
        %v921 = vunpack.c.h.b16 %v462
        %v922 = vunpack.c.l.b16 %v463
        %v923 = vunpack.c.h.b16 %v463
        %v924 = vunpack.c.l.b16 %v464
        %v925 = vunpack.c.h.b16 %v464
        %v926 = vunpack.c.l.b16 %v465
        %v927 = vunpack.c.h.b16 %v465
        %v928 = vunpack.c.l.b16 %v466
        %v929 = vunpack.c.h.b16 %v466
        %v930 = vunpack.c.l.b16 %v467
        %v931 = vunpack.c.h.b16 %v467
        %v932 = vunpack.c.l.b16 %v468
        %v933 = vunpack.c.h.b16 %v468
        %v934 = vunpack.c.l.b16 %v469
        %v935 = vunpack.c.h.b16 %v469
        %v936 = vunpack.c.l.b16 %v470
        %v937 = vunpack.c.h.b16 %v470
        %v938 = vunpack.c.l.b16 %v471
        %v939 = vunpack.c.h.b16 %v471
        %v940 = vunpack.c.l.b16 %v472
        %v941 = vunpack.c.h.b16 %v472
        %v942 = vunpack.c.l.b16 %v473
        %v943 = vunpack.c.h.b16 %v473
        %v944 = vunpack.c.l.b16 %v474
        %v945 = vunpack.c.h.b16 %v474
        %v946 = vunpack.c.l.b16 %v475
        %v947 = vunpack.c.h.b16 %v475
        %v948 = vunpack.c.l.b16 %v476
        %v949 = vunpack.c.h.b16 %v476
        %v950 = vunpack.c.l.b16 %v477
        %v951 = vunpack.c.h.b16 %v477
        %v952 = vunpack.c.l.b16 %v478
        %v953 = vunpack.c.h.b16 %v478
        %v954 = vunpack.c.l.b16 %v479
        %v955 = vunpack.c.h.b16 %v479
        %v956 = vunpack.c.l.b16 %v480
        %v957 = vunpack.c.h.b16 %v480
        %v958 = vunpack.c.l.b16 %v481
        %v959 = vunpack.c.h.b16 %v481
        %v960 = vunpack.c.l.b16 %v482
        %v961 = vunpack.c.h.b16 %v482
        %v962 = vunpack.c.l.b16 %v483
        %v963 = vunpack.c.h.b16 %v483
        %v964 = vunpack.c.l.b16 %v484
        %v965 = vunpack.c.h.b16 %v484
        %v966 = vunpack.c.l.b16 %v485
        %v967 = vunpack.c.h.b16 %v485
        %v968 = vunpack.c.l.b16 %v486
        %v969 = vunpack.c.h.b16 %v486
        %v970 = vunpack.c.l.b16 %v487
        %v971 = vunpack.c.h.b16 %v487
        %v972 = vunpack.c.l.b16 %v488
        %v973 = vunpack.c.h.b16 %v488
        %v974 = vunpack.c.l.b16 %v489
        %v975 = vunpack.c.h.b16 %v489
        %v976 = vunpack.c.l.b16 %v490
        %v977 = vunpack.c.h.b16 %v490
        %v978 = vunpack.c.l.b16 %v491
        %v979 = vunpack.c.h.b16 %v491
        %v980 = vunpack.c.l.b16 %v492
        %v981 = vunpack.c.h.b16 %v492
        %v982 = vunpack.c.l.b16 %v493
        %v983 = vunpack.c.h.b16 %v493
        %v984 = vunpack.c.l.b16 %v494
        %v985 = vunpack.c.h.b16 %v494
        %v986 = vunpack.c.l.b16 %v495
        %v987 = vunpack.c.h.b16 %v495
        %v988 = vunpack.c.l.b16 %v496
        %v989 = vunpack.c.h.b16 %v496
        %v990 = vunpack.c.l.b16 %v497
        %v991 = vunpack.c.h.b16 %v497
        %v992 = vunpack.c.l.b16 %v498
        %v993 = vunpack.c.h.b16 %v498
        %v994 = vunpack.c.l.b16 %v499
        %v995 = vunpack.c.h.b16 %v499
        %v996 = vunpack.c.l.b16 %v500
        %v997 = vunpack.c.h.b16 %v500
        %v998 = vunpack.c.l.b16 %v501
        %v999 = vunpack.c.h.b16 %v501
        %v1000 = vunpack.c.l.b16 %v502
        %v1001 = vunpack.c.h.b16 %v502
        %v1002 = vunpack.c.l.b16 %v503
        %v1003 = vunpack.c.h.b16 %v503
        %v1004 = vunpack.c.l.b16 %v504
        %v1005 = vunpack.c.h.b16 %v504
        %v1006 = vunpack.c.l.b16 %v505
        %v1007 = vunpack.c.h.b16 %v505
        %v1008 = vunpack.c.l.b16 %v506
        %v1009 = vunpack.c.h.b16 %v506
        %v1010 = vunpack.c.l.b16 %v507
        %v1011 = vunpack.c.h.b16 %v507
        %v1012 = vunpack.c.l.b16 %v508
        %v1013 = vunpack.c.h.b16 %v508
        %v1014 = vunpack.c.l.b16 %v509
        %v1015 = vunpack.c.h.b16 %v509
        %v1016 = vunpack.c.l.b16 %v510
        %v1017 = vunpack.c.h.b16 %v510
        %v1018 = vunpack.c.l.b16 %v511
        %v1019 = vunpack.c.h.b16 %v511
        %v1020 = vunpack.c.l.b16 %v512
        %v1021 = vunpack.c.h.b16 %v512
        %v1022 = vunpack.c.l.b16 %v513
        %v1023 = vunpack.c.h.b16 %v513
        %v1024 = vunpack.c.l.b16 %v514
        %v1025 = vunpack.c.h.b16 %v514
        %v1026 = vunpack.c.l.b16 %v515
        %v1027 = vunpack.c.h.b16 %v515
        %v1028 = vunpack.c.l.b16 %v516
        %v1029 = vunpack.c.h.b16 %v516
        %v1030 = vunpack.c.l.b16 %v517
        %v1031 = vunpack.c.h.b16 %v517
        %v1032 = vunpack.c.l.b16 %v518
        %v1033 = vunpack.c.h.b16 %v518
        %v1034 = vunpack.c.l.b16 %v519
        %v1035 = vunpack.c.h.b16 %v519
        %v1036 = vunpack.c.l.b16 %v520
        %v1037 = vunpack.c.h.b16 %v520
        %v1038 = vunpack.c.l.b16 %v521
        %v1039 = vunpack.c.h.b16 %v521
        %v1040 = vunpack.c.l.b16 %v522
        %v1041 = vunpack.c.h.b16 %v522
        %v1042 = vunpack.c.l.b16 %v523
        %v1043 = vunpack.c.h.b16 %v523
        %v1044 = vunpack.c.l.b16 %v524
        %v1045 = vunpack.c.h.b16 %v524
        %v1046 = vunpack.c.l.b16 %v525
        %v1047 = vunpack.c.h.b16 %v525
        %v1048 = vunpack.c.l.b16 %v526
        %v1049 = vunpack.c.h.b16 %v526
        %v1050 = vunpack.c.l.b16 %v527
        %v1051 = vunpack.c.h.b16 %v527
        %v1052 = vunpack.c.l.b16 %v528
        %v1053 = vunpack.c.h.b16 %v528
        %v1054 = vunpack.c.l.b16 %v529
        %v1055 = vunpack.c.h.b16 %v529
        %v1056 = vunpack.c.l.b16 %v530
        %v1057 = vunpack.c.h.b16 %v530
        %v1058 = vunpack.c.l.b16 %v531
        %v1059 = vunpack.c.h.b16 %v531
        %v1060 = vunpack.c.l.b16 %v532
        %v1061 = vunpack.c.h.b16 %v532
        %v1062 = vunpack.c.l.b16 %v533
        %v1063 = vunpack.c.h.b16 %v533
        %v1064 = vunpack.c.l.b16 %v534
        %v1065 = vunpack.c.h.b16 %v534
        %v1066 = vunpack.c.l.b16 %v535
        %v1067 = vunpack.c.h.b16 %v535
        %v1068 = vunpack.c.l.b16 %v536
        %v1069 = vunpack.c.h.b16 %v536
        %v1070 = vunpack.c.l.b16 %v537
        %v1071 = vunpack.c.h.b16 %v537
        %v1072 = vunpack.c.l.b16 %v538
        %v1073 = vunpack.c.h.b16 %v538
        %v1074 = vunpack.c.l.b16 %v539
        %v1075 = vunpack.c.h.b16 %v539
        %v1076 = vunpack.c.l.b16 %v540
        %v1077 = vunpack.c.h.b16 %v540
        %v1078 = vunpack.c.l.b16 %v541
        %v1079 = vunpack.c.h.b16 %v541
        %v1080 = vunpack.c.l.b16 %v542
        %v1081 = vunpack.c.h.b16 %v542
        %v1082 = vunpack.c.l.b16 %v543
        %v1083 = vunpack.c.h.b16 %v543
        %v1084 = vunpack.c.l.b16 %v544
        %v1085 = vunpack.c.h.b16 %v544
        %v1086 = vunpack.c.l.b16 %v545
        %v1087 = vunpack.c.h.b16 %v545
        %v1088 = vunpack.c.l.b16 %v546
        %v1089 = vunpack.c.h.b16 %v546
        %v1090 = vunpack.c.l.b16 %v547
        %v1091 = vunpack.c.h.b16 %v547
        %v1092 = vunpack.c.l.b16 %v548
        %v1093 = vunpack.c.h.b16 %v548
        %v1094 = vunpack.c.l.b16 %v549
        %v1095 = vunpack.c.h.b16 %v549
        %v1096 = vunpack.c.l.b16 %v550
        %v1097 = vunpack.c.h.b16 %v550
        %v1098 = vunpack.c.l.b16 %v551
        %v1099 = vunpack.c.h.b16 %v551
        %v1100 = vunpack.c.l.b16 %v552
        %v1101 = vunpack.c.h.b16 %v552
        %v1102 = vunpack.c.l.b16 %v553
        %v1103 = vunpack.c.h.b16 %v553
        %v1104 = vunpack.c.l.b16 %v554
        %v1105 = vunpack.c.h.b16 %v554
        %v1106 = vunpack.c.l.b16 %v555
        %v1107 = vunpack.c.h.b16 %v555
        %v1108 = vunpack.c.l.b16 %v556
        %v1109 = vunpack.c.h.b16 %v556
        %v1110 = vunpack.c.l.b16 %v557
        %v1111 = vunpack.c.h.b16 %v557
        %v1112 = vunpack.c.l.b16 %v558
        %v1113 = vunpack.c.h.b16 %v558
        %v1114 = vunpack.c.l.b16 %v559
        %v1115 = vunpack.c.h.b16 %v559
        %v1116 = vunpack.c.l.b16 %v560
        %v1117 = vunpack.c.h.b16 %v560
        %v1118 = vunpack.c.l.b16 %v561
        %v1119 = vunpack.c.h.b16 %v561
        %v1120 = vunpack.c.l.b16 %v562
        %v1121 = vunpack.c.h.b16 %v562
        %v1122 = vunpack.c.l.b16 %v563
        %v1123 = vunpack.c.h.b16 %v563
        %v1124 = vunpack.c.l.b16 %v564
        %v1125 = vunpack.c.h.b16 %v564
        %v1126 = vunpack.c.l.b16 %v565
        %v1127 = vunpack.c.h.b16 %v565
        %v1128 = vunpack.c.l.b16 %v566
        %v1129 = vunpack.c.h.b16 %v566
        %v1130 = vunpack.c.l.b16 %v567
        %v1131 = vunpack.c.h.b16 %v567
        %v1132 = vunpack.c.l.b16 %v568
        %v1133 = vunpack.c.h.b16 %v568
        %v1134 = vunpack.c.l.b16 %v569
        %v1135 = vunpack.c.h.b16 %v569
        %v1136 = vunpack.c.l.b16 %v570
        %v1137 = vunpack.c.h.b16 %v570
        %v1138 = vunpack.c.l.b16 %v571
        %v1139 = vunpack.c.h.b16 %v571
        %v1140 = vunpack.c.l.b16 %v572
        %v1141 = vunpack.c.h.b16 %v572
        %v1142 = vunpack.c.l.b16 %v573
        %v1143 = vunpack.c.h.b16 %v573
        %v1144 = vunpack.c.l.b16 %v574
        %v1145 = vunpack.c.h.b16 %v574
        %v1146 = vunpack.c.l.b16 %v575
        %v1147 = vunpack.c.h.b16 %v575
        %v1148 = vunpack.c.l.b16 %v576
        %v1149 = vunpack.c.h.b16 %v576
        %v1150 = vunpack.c.l.b16 %v577
        %v1151 = vunpack.c.h.b16 %v577
        %v1152 = vunpack.c.l.b16 %v578
        %v1153 = vunpack.c.h.b16 %v578
        %v1154 = vunpack.c.l.b16 %v579
        %v1155 = vunpack.c.h.b16 %v579
        %v1156 = vpack.c.b16 %v776, %v772
        %v1157 = vpack.c.b16 %v777, %v773
        %v1158 = vpack.c.b16 %v778, %v774
        %v1159 = vpack.c.b16 %v779, %v775
        %v1160 = vpack.c.b16 %v784, %v780
        %v1161 = vpack.c.b16 %v785, %v781
        %v1162 = vpack.c.b16 %v786, %v782
        %v1163 = vpack.c.b16 %v787, %v783
        %v1164 = vpack.c.b16 %v792, %v788
        %v1165 = vpack.c.b16 %v793, %v789
        %v1166 = vpack.c.b16 %v794, %v790
        %v1167 = vpack.c.b16 %v795, %v791
        %v1168 = vpack.c.b16 %v800, %v796
        %v1169 = vpack.c.b16 %v801, %v797
        %v1170 = vpack.c.b16 %v802, %v798
        %v1171 = vpack.c.b16 %v803, %v799
        %v1172 = vpack.c.b16 %v808, %v804
        %v1173 = vpack.c.b16 %v809, %v805
        %v1174 = vpack.c.b16 %v810, %v806
        %v1175 = vpack.c.b16 %v811, %v807
        %v1176 = vpack.c.b16 %v816, %v812
        %v1177 = vpack.c.b16 %v817, %v813
        %v1178 = vpack.c.b16 %v818, %v814
        %v1179 = vpack.c.b16 %v819, %v815
        %v1180 = vpack.c.b16 %v824, %v820
        %v1181 = vpack.c.b16 %v825, %v821
        %v1182 = vpack.c.b16 %v826, %v822
        %v1183 = vpack.c.b16 %v827, %v823
        %v1184 = vpack.c.b16 %v832, %v828
        %v1185 = vpack.c.b16 %v833, %v829
        %v1186 = vpack.c.b16 %v834, %v830
        %v1187 = vpack.c.b16 %v835, %v831
        %v1188 = vpack.c.b16 %v840, %v836
        %v1189 = vpack.c.b16 %v841, %v837
        %v1190 = vpack.c.b16 %v842, %v838
        %v1191 = vpack.c.b16 %v843, %v839
        %v1192 = vpack.c.b16 %v848, %v844
        %v1193 = vpack.c.b16 %v849, %v845
        %v1194 = vpack.c.b16 %v850, %v846
        %v1195 = vpack.c.b16 %v851, %v847
        %v1196 = vpack.c.b16 %v856, %v852
        %v1197 = vpack.c.b16 %v857, %v853
        %v1198 = vpack.c.b16 %v858, %v854
        %v1199 = vpack.c.b16 %v859, %v855
        %v1200 = vpack.c.b16 %v864, %v860
        %v1201 = vpack.c.b16 %v865, %v861
        %v1202 = vpack.c.b16 %v866, %v862
        %v1203 = vpack.c.b16 %v867, %v863
        %v1204 = vpack.c.b16 %v872, %v868
        %v1205 = vpack.c.b16 %v873, %v869
        %v1206 = vpack.c.b16 %v874, %v870
        %v1207 = vpack.c.b16 %v875, %v871
        %v1208 = vpack.c.b16 %v880, %v876
        %v1209 = vpack.c.b16 %v881, %v877
        %v1210 = vpack.c.b16 %v882, %v878
        %v1211 = vpack.c.b16 %v883, %v879
        %v1212 = vpack.c.b16 %v888, %v884
        %v1213 = vpack.c.b16 %v889, %v885
        %v1214 = vpack.c.b16 %v890, %v886
        %v1215 = vpack.c.b16 %v891, %v887
        %v1216 = vpack.c.b16 %v896, %v892
        %v1217 = vpack.c.b16 %v897, %v893
        %v1218 = vpack.c.b16 %v898, %v894
        %v1219 = vpack.c.b16 %v899, %v895
        %v1220 = vpack.c.b16 %v904, %v900
        %v1221 = vpack.c.b16 %v905, %v901
        %v1222 = vpack.c.b16 %v906, %v902
        %v1223 = vpack.c.b16 %v907, %v903
        %v1224 = vpack.c.b16 %v912, %v908
        %v1225 = vpack.c.b16 %v913, %v909
        %v1226 = vpack.c.b16 %v914, %v910
        %v1227 = vpack.c.b16 %v915, %v911
        %v1228 = vpack.c.b16 %v920, %v916
        %v1229 = vpack.c.b16 %v921, %v917
        %v1230 = vpack.c.b16 %v922, %v918
        %v1231 = vpack.c.b16 %v923, %v919
        %v1232 = vpack.c.b16 %v928, %v924
        %v1233 = vpack.c.b16 %v929, %v925
        %v1234 = vpack.c.b16 %v930, %v926
        %v1235 = vpack.c.b16 %v931, %v927
        %v1236 = vpack.c.b16 %v936, %v932
        %v1237 = vpack.c.b16 %v937, %v933
        %v1238 = vpack.c.b16 %v938, %v934
        %v1239 = vpack.c.b16 %v939, %v935
        %v1240 = vpack.c.b16 %v944, %v940
        %v1241 = vpack.c.b16 %v945, %v941
        %v1242 = vpack.c.b16 %v946, %v942
        %v1243 = vpack.c.b16 %v947, %v943
        %v1244 = vpack.c.b16 %v952, %v948
        %v1245 = vpack.c.b16 %v953, %v949
        %v1246 = vpack.c.b16 %v954, %v950
        %v1247 = vpack.c.b16 %v955, %v951
        %v1248 = vpack.c.b16 %v960, %v956
        %v1249 = vpack.c.b16 %v961, %v957
        %v1250 = vpack.c.b16 %v962, %v958
        %v1251 = vpack.c.b16 %v963, %v959
        %v1252 = vpack.c.b16 %v968, %v964
        %v1253 = vpack.c.b16 %v969, %v965
        %v1254 = vpack.c.b16 %v970, %v966
        %v1255 = vpack.c.b16 %v971, %v967
        %v1256 = vpack.c.b16 %v976, %v972
        %v1257 = vpack.c.b16 %v977, %v973
        %v1258 = vpack.c.b16 %v978, %v974
        %v1259 = vpack.c.b16 %v979, %v975
        %v1260 = vpack.c.b16 %v984, %v980
        %v1261 = vpack.c.b16 %v985, %v981
        %v1262 = vpack.c.b16 %v986, %v982
        %v1263 = vpack.c.b16 %v987, %v983
        %v1264 = vpack.c.b16 %v992, %v988
        %v1265 = vpack.c.b16 %v993, %v989
        %v1266 = vpack.c.b16 %v994, %v990
        %v1267 = vpack.c.b16 %v995, %v991
        %v1268 = vpack.c.b16 %v1000, %v996
        %v1269 = vpack.c.b16 %v1001, %v997
        %v1270 = vpack.c.b16 %v1002, %v998
        %v1271 = vpack.c.b16 %v1003, %v999
        %v1272 = vpack.c.b16 %v1008, %v1004
        %v1273 = vpack.c.b16 %v1009, %v1005
        %v1274 = vpack.c.b16 %v1010, %v1006
        %v1275 = vpack.c.b16 %v1011, %v1007
        %v1276 = vpack.c.b16 %v1016, %v1012
        %v1277 = vpack.c.b16 %v1017, %v1013
        %v1278 = vpack.c.b16 %v1018, %v1014
        %v1279 = vpack.c.b16 %v1019, %v1015
        %v1280 = vpack.c.b16 %v1024, %v1020
        %v1281 = vpack.c.b16 %v1025, %v1021
        %v1282 = vpack.c.b16 %v1026, %v1022
        %v1283 = vpack.c.b16 %v1027, %v1023
        %v1284 = vpack.c.b16 %v1032, %v1028
        %v1285 = vpack.c.b16 %v1033, %v1029
        %v1286 = vpack.c.b16 %v1034, %v1030
        %v1287 = vpack.c.b16 %v1035, %v1031
        %v1288 = vpack.c.b16 %v1040, %v1036
        %v1289 = vpack.c.b16 %v1041, %v1037
        %v1290 = vpack.c.b16 %v1042, %v1038
        %v1291 = vpack.c.b16 %v1043, %v1039
        %v1292 = vpack.c.b16 %v1048, %v1044
        %v1293 = vpack.c.b16 %v1049, %v1045
        %v1294 = vpack.c.b16 %v1050, %v1046
        %v1295 = vpack.c.b16 %v1051, %v1047
        %v1296 = vpack.c.b16 %v1056, %v1052
        %v1297 = vpack.c.b16 %v1057, %v1053
        %v1298 = vpack.c.b16 %v1058, %v1054
        %v1299 = vpack.c.b16 %v1059, %v1055
        %v1300 = vpack.c.b16 %v1064, %v1060
        %v1301 = vpack.c.b16 %v1065, %v1061
        %v1302 = vpack.c.b16 %v1066, %v1062
        %v1303 = vpack.c.b16 %v1067, %v1063
        %v1304 = vpack.c.b16 %v1072, %v1068
        %v1305 = vpack.c.b16 %v1073, %v1069
        %v1306 = vpack.c.b16 %v1074, %v1070
        %v1307 = vpack.c.b16 %v1075, %v1071
        %v1308 = vpack.c.b16 %v1080, %v1076
        %v1309 = vpack.c.b16 %v1081, %v1077
        %v1310 = vpack.c.b16 %v1082, %v1078
        %v1311 = vpack.c.b16 %v1083, %v1079
        %v1312 = vpack.c.b16 %v1088, %v1084
        %v1313 = vpack.c.b16 %v1089, %v1085
        %v1314 = vpack.c.b16 %v1090, %v1086
        %v1315 = vpack.c.b16 %v1091, %v1087
        %v1316 = vpack.c.b16 %v1096, %v1092
        %v1317 = vpack.c.b16 %v1097, %v1093
        %v1318 = vpack.c.b16 %v1098, %v1094
        %v1319 = vpack.c.b16 %v1099, %v1095
        %v1320 = vpack.c.b16 %v1104, %v1100
        %v1321 = vpack.c.b16 %v1105, %v1101
        %v1322 = vpack.c.b16 %v1106, %v1102
        %v1323 = vpack.c.b16 %v1107, %v1103
        %v1324 = vpack.c.b16 %v1112, %v1108
        %v1325 = vpack.c.b16 %v1113, %v1109
        %v1326 = vpack.c.b16 %v1114, %v1110
        %v1327 = vpack.c.b16 %v1115, %v1111
        %v1328 = vpack.c.b16 %v1120, %v1116
        %v1329 = vpack.c.b16 %v1121, %v1117
        %v1330 = vpack.c.b16 %v1122, %v1118
        %v1331 = vpack.c.b16 %v1123, %v1119
        %v1332 = vpack.c.b16 %v1128, %v1124
        %v1333 = vpack.c.b16 %v1129, %v1125
        %v1334 = vpack.c.b16 %v1130, %v1126
        %v1335 = vpack.c.b16 %v1131, %v1127
        %v1336 = vpack.c.b16 %v1136, %v1132
        %v1337 = vpack.c.b16 %v1137, %v1133
        %v1338 = vpack.c.b16 %v1138, %v1134
        %v1339 = vpack.c.b16 %v1139, %v1135
        %v1340 = vpack.c.b16 %v1144, %v1140
        %v1341 = vpack.c.b16 %v1145, %v1141
        %v1342 = vpack.c.b16 %v1146, %v1142
        %v1343 = vpack.c.b16 %v1147, %v1143
        %v1344 = vpack.c.b16 %v1152, %v1148
        %v1345 = vpack.c.b16 %v1153, %v1149
        %v1346 = vpack.c.b16 %v1154, %v1150
        %v1347 = vpack.c.b16 %v1155, %v1151
        %1540 = vmatprep.subr.bf16.mxu0 %v1157
        %1541 = vmatpush1.bf16.msra.mxu0 %v1156
        %1542 = vmatprep.subr.bf16.mxu0 %v1161
        %1543 = vmatpush1.bf16.msra.mxu0 %v1160
        %1544 = vmatprep.subr.bf16.mxu0 %v1165
        %1545 = vmatpush1.bf16.msra.mxu0 %v1164
        %1546 = vmatprep.subr.bf16.mxu0 %v1169
        %1547 = vmatpush1.bf16.msra.mxu0 %v1168
        %1548 = vmatprep.subr.bf16.mxu0 %v1173
        %1549 = vmatpush1.bf16.msra.mxu0 %v1172
        %1550 = vmatprep.subr.bf16.mxu0 %v1177
        %1551 = vmatpush1.bf16.msra.mxu0 %v1176
        %1552 = vmatprep.subr.bf16.mxu0 %v1181
        %1553 = vmatpush1.bf16.msra.mxu0 %v1180
        %1554 = vmatprep.subr.bf16.mxu0 %v1185
        %1555 = vmatpush1.bf16.msra.mxu0 %v1184
        %1556 = vmatprep.subr.bf16.mxu0 %v1189
        %1557 = vmatpush1.bf16.msra.mxu0 %v1188
        %1558 = vmatprep.subr.bf16.mxu0 %v1193
        %1559 = vmatpush1.bf16.msra.mxu0 %v1192
        %1560 = vmatprep.subr.bf16.mxu0 %v1197
        %1561 = vmatpush1.bf16.msra.mxu0 %v1196
        %1562 = vmatprep.subr.bf16.mxu0 %v1201
        %1563 = vmatpush1.bf16.msra.mxu0 %v1200
        %1564 = vmatprep.subr.bf16.mxu0 %v1205
        %1565 = vmatpush1.bf16.msra.mxu0 %v1204
        %1566 = vmatprep.subr.bf16.mxu0 %v1209
        %1567 = vmatpush1.bf16.msra.mxu0 %v1208
        %1568 = vmatprep.subr.bf16.mxu0 %v1213
        %1569 = vmatpush1.bf16.msra.mxu0 %v1212
        %1570 = vmatprep.subr.bf16.mxu0 %v1217
        %1571 = vmatpush1.bf16.msra.mxu0 %v1216
        %1572 = vmatprep.mubr.bf16.mxu0 %v365
        %1573 = vmatmul.mubr.bf16.gmra.mrb[0].mxu0 %v364
        %v1574 = vpop.f32.mrb[0].mxu0
        %v1575 = vadd.f32 0.0, %v1574
        %v1576 = vpop.f32.mrb[0].mxu0
        %v1577 = vadd.f32 0.0, %v1576
        %v1578 = vpop.f32.mrb[0].mxu0
        %v1579 = vadd.f32 0.0, %v1578
        %v1580 = vpop.f32.mrb[0].mxu0
        %v1581 = vadd.f32 0.0, %v1580
        %1582 = vmatprep.mubr.bf16.mxu0 %v367
        %1583 = vmatmul.mubr.bf16.gmra.mrb[0].mxu0 %v366
        %v1584 = vpop.f32.mrb[0].mxu0
        %v1585 = vadd.f32 0.0, %v1584
        %v1586 = vpop.f32.mrb[0].mxu0
        %v1587 = vadd.f32 0.0, %v1586
        %v1588 = vpop.f32.mrb[0].mxu0
        %v1589 = vadd.f32 0.0, %v1588
        %v1590 = vpop.f32.mrb[0].mxu0
        %v1591 = vadd.f32 0.0, %v1590
        %1592 = vdwg.mxu0
        %1593 = vmatprep.subr.bf16.mxu0 %v1221
        %1594 = vmatpush1.bf16.msra.mxu0 %v1220
        %1595 = vmatprep.subr.bf16.mxu0 %v1225
        %1596 = vmatpush1.bf16.msra.mxu0 %v1224
        %1597 = vmatprep.subr.bf16.mxu0 %v1229
        %1598 = vmatpush1.bf16.msra.mxu0 %v1228
        %1599 = vmatprep.subr.bf16.mxu0 %v1233
        %1600 = vmatpush1.bf16.msra.mxu0 %v1232
        %1601 = vmatprep.subr.bf16.mxu0 %v1237
        %1602 = vmatpush1.bf16.msra.mxu0 %v1236
        %1603 = vmatprep.subr.bf16.mxu0 %v1241
        %1604 = vmatpush1.bf16.msra.mxu0 %v1240
        %1605 = vmatprep.subr.bf16.mxu0 %v1245
        %1606 = vmatpush1.bf16.msra.mxu0 %v1244
        %1607 = vmatprep.subr.bf16.mxu0 %v1249
        %1608 = vmatpush1.bf16.msra.mxu0 %v1248
        %1609 = vmatprep.subr.bf16.mxu0 %v1253
        %1610 = vmatpush1.bf16.msra.mxu0 %v1252
        %1611 = vmatprep.subr.bf16.mxu0 %v1257
        %1612 = vmatpush1.bf16.msra.mxu0 %v1256
        %1613 = vmatprep.subr.bf16.mxu0 %v1261
        %1614 = vmatpush1.bf16.msra.mxu0 %v1260
        %1615 = vmatprep.subr.bf16.mxu0 %v1265
        %1616 = vmatpush1.bf16.msra.mxu0 %v1264
        %1617 = vmatprep.subr.bf16.mxu0 %v1269
        %1618 = vmatpush1.bf16.msra.mxu0 %v1268
        %1619 = vmatprep.subr.bf16.mxu0 %v1273
        %1620 = vmatpush1.bf16.msra.mxu0 %v1272
        %1621 = vmatprep.subr.bf16.mxu0 %v1277
        %1622 = vmatpush1.bf16.msra.mxu0 %v1276
        %1623 = vmatprep.subr.bf16.mxu0 %v1281
        %1624 = vmatpush1.bf16.msra.mxu0 %v1280
        %1625 = vmatprep.mubr.bf16.mxu0 %v385
        %1626 = vmatmul.mubr.bf16.gmra.mrb[0].mxu0 %v384
        %v1627 = vpop.f32.mrb[0].mxu0
        %v1628 = vadd.f32 %v1575, %v1627
        %v1629 = vpop.f32.mrb[0].mxu0
        %v1630 = vadd.f32 %v1577, %v1629
        %v1631 = vpop.f32.mrb[0].mxu0
        %v1632 = vadd.f32 %v1579, %v1631
        %v1633 = vpop.f32.mrb[0].mxu0
        %v1634 = vadd.f32 %v1581, %v1633
        %1635 = vmatprep.mubr.bf16.mxu0 %v387
        %1636 = vmatmul.mubr.bf16.gmra.mrb[0].mxu0 %v386
        %v1637 = vpop.f32.mrb[0].mxu0
        %v1638 = vadd.f32 %v1585, %v1637
        %v1639 = vpop.f32.mrb[0].mxu0
        %v1640 = vadd.f32 %v1587, %v1639
        %v1641 = vpop.f32.mrb[0].mxu0
        %v1642 = vadd.f32 %v1589, %v1641
        %v1643 = vpop.f32.mrb[0].mxu0
        %v1644 = vadd.f32 %v1591, %v1643
        %1645 = vdwg.mxu0
        %1646 = vmatprep.subr.bf16.mxu0 %v1285
        %1647 = vmatpush1.bf16.msra.mxu0 %v1284
        %1648 = vmatprep.subr.bf16.mxu0 %v1289
        %1649 = vmatpush1.bf16.msra.mxu0 %v1288
        %1650 = vmatprep.subr.bf16.mxu0 %v1293
        %1651 = vmatpush1.bf16.msra.mxu0 %v1292
        %1652 = vmatprep.subr.bf16.mxu0 %v1297
        %1653 = vmatpush1.bf16.msra.mxu0 %v1296
        %1654 = vmatprep.subr.bf16.mxu0 %v1301
        %1655 = vmatpush1.bf16.msra.mxu0 %v1300
        %1656 = vmatprep.subr.bf16.mxu0 %v1305
        %1657 = vmatpush1.bf16.msra.mxu0 %v1304
        %1658 = vmatprep.subr.bf16.mxu0 %v1309
        %1659 = vmatpush1.bf16.msra.mxu0 %v1308
        %1660 = vmatprep.subr.bf16.mxu0 %v1313
        %1661 = vmatpush1.bf16.msra.mxu0 %v1312
        %1662 = vmatprep.subr.bf16.mxu0 %v1317
        %1663 = vmatpush1.bf16.msra.mxu0 %v1316
        %1664 = vmatprep.subr.bf16.mxu0 %v1321
        %1665 = vmatpush1.bf16.msra.mxu0 %v1320
        %1666 = vmatprep.subr.bf16.mxu0 %v1325
        %1667 = vmatpush1.bf16.msra.mxu0 %v1324
        %1668 = vmatprep.subr.bf16.mxu0 %v1329
        %1669 = vmatpush1.bf16.msra.mxu0 %v1328
        %1670 = vmatprep.subr.bf16.mxu0 %v1333
        %1671 = vmatpush1.bf16.msra.mxu0 %v1332
        %1672 = vmatprep.subr.bf16.mxu0 %v1337
        %1673 = vmatpush1.bf16.msra.mxu0 %v1336
        %1674 = vmatprep.subr.bf16.mxu0 %v1341
        %1675 = vmatpush1.bf16.msra.mxu0 %v1340
        %1676 = vmatprep.subr.bf16.mxu0 %v1345
        %1677 = vmatpush1.bf16.msra.mxu0 %v1344
        %1678 = vmatprep.mubr.bf16.mxu0 %v365
        %1679 = vmatmul.mubr.bf16.gmra.mrb[0].mxu0 %v364
        %v1680 = vpop.f32.mrb[0].mxu0
        %v1681 = vadd.f32 %v1628, %v1680
        %v1682 = vpop.f32.mrb[0].mxu0
        %v1683 = vadd.f32 %v1630, %v1682
        %v1684 = vpop.f32.mrb[0].mxu0
        %v1685 = vadd.f32 %v1632, %v1684
        %v1686 = vpop.f32.mrb[0].mxu0
        %v1687 = vadd.f32 %v1634, %v1686
        %1688 = vmatprep.mubr.bf16.mxu0 %v367
        %1689 = vmatmul.mubr.bf16.gmra.mrb[0].mxu0 %v366
        %v1690 = vpop.f32.mrb[0].mxu0
        %v1691 = vadd.f32 %v1638, %v1690
        %v1692 = vpop.f32.mrb[0].mxu0
        %v1693 = vadd.f32 %v1640, %v1692
        %v1694 = vpop.f32.mrb[0].mxu0
        %v1695 = vadd.f32 %v1642, %v1694
        %v1696 = vpop.f32.mrb[0].mxu0
        %v1697 = vadd.f32 %v1644, %v1696
        %1698 = vdwg.mxu0
        %1699 = vmatprep.subr.bf16.mxu0 %v1159
        %1700 = vmatpush1.bf16.msra.mxu0 %v1158
        %1701 = vmatprep.subr.bf16.mxu0 %v1163
        %1702 = vmatpush1.bf16.msra.mxu0 %v1162
        %1703 = vmatprep.subr.bf16.mxu0 %v1167
        %1704 = vmatpush1.bf16.msra.mxu0 %v1166
        %1705 = vmatprep.subr.bf16.mxu0 %v1171
        %1706 = vmatpush1.bf16.msra.mxu0 %v1170
        %1707 = vmatprep.subr.bf16.mxu0 %v1175
        %1708 = vmatpush1.bf16.msra.mxu0 %v1174
        %1709 = vmatprep.subr.bf16.mxu0 %v1179
        %1710 = vmatpush1.bf16.msra.mxu0 %v1178
        %1711 = vmatprep.subr.bf16.mxu0 %v1183
        %1712 = vmatpush1.bf16.msra.mxu0 %v1182
        %1713 = vmatprep.subr.bf16.mxu0 %v1187
        %1714 = vmatpush1.bf16.msra.mxu0 %v1186
        %1715 = vmatprep.subr.bf16.mxu0 %v1191
        %1716 = vmatpush1.bf16.msra.mxu0 %v1190
        %1717 = vmatprep.subr.bf16.mxu0 %v1195
        %1718 = vmatpush1.bf16.msra.mxu0 %v1194
        %1719 = vmatprep.subr.bf16.mxu0 %v1199
        %1720 = vmatpush1.bf16.msra.mxu0 %v1198
        %1721 = vmatprep.subr.bf16.mxu0 %v1203
        %1722 = vmatpush1.bf16.msra.mxu0 %v1202
        %1723 = vmatprep.subr.bf16.mxu0 %v1207
        %1724 = vmatpush1.bf16.msra.mxu0 %v1206
        %1725 = vmatprep.subr.bf16.mxu0 %v1211
        %1726 = vmatpush1.bf16.msra.mxu0 %v1210
        %1727 = vmatprep.subr.bf16.mxu0 %v1215
        %1728 = vmatpush1.bf16.msra.mxu0 %v1214
        %1729 = vmatprep.subr.bf16.mxu0 %v1219
        %1730 = vmatpush1.bf16.msra.mxu0 %v1218
        %1731 = vmatprep.mubr.bf16.mxu0 %v365
        %1732 = vmatmul.mubr.bf16.gmra.mrb[0].mxu0 %v364
        %v1733 = vpop.f32.mrb[0].mxu0
        %v1734 = vadd.f32 0.0, %v1733
        %v1735 = vpop.f32.mrb[0].mxu0
        %v1736 = vadd.f32 0.0, %v1735
        %v1737 = vpop.f32.mrb[0].mxu0
        %v1738 = vadd.f32 0.0, %v1737
        %v1739 = vpop.f32.mrb[0].mxu0
        %v1740 = vadd.f32 0.0, %v1739
        %1741 = vmatprep.mubr.bf16.mxu0 %v367
        %1742 = vmatmul.mubr.bf16.gmra.mrb[0].mxu0 %v366
        %v1743 = vpop.f32.mrb[0].mxu0
        %v1744 = vadd.f32 0.0, %v1743
        %v1745 = vpop.f32.mrb[0].mxu0
        %v1746 = vadd.f32 0.0, %v1745
        %v1747 = vpop.f32.mrb[0].mxu0
        %v1748 = vadd.f32 0.0, %v1747
        %v1749 = vpop.f32.mrb[0].mxu0
        %v1750 = vadd.f32 0.0, %v1749
        %1751 = vdwg.mxu0
        %1752 = vmatprep.subr.bf16.mxu0 %v1223
        %1753 = vmatpush1.bf16.msra.mxu0 %v1222
        %1754 = vmatprep.subr.bf16.mxu0 %v1227
        %1755 = vmatpush1.bf16.msra.mxu0 %v1226
        %1756 = vmatprep.subr.bf16.mxu0 %v1231
        %1757 = vmatpush1.bf16.msra.mxu0 %v1230
        %1758 = vmatprep.subr.bf16.mxu0 %v1235
        %1759 = vmatpush1.bf16.msra.mxu0 %v1234
        %1760 = vmatprep.subr.bf16.mxu0 %v1239
        %1761 = vmatpush1.bf16.msra.mxu0 %v1238
        %1762 = vmatprep.subr.bf16.mxu0 %v1243
        %1763 = vmatpush1.bf16.msra.mxu0 %v1242
        %1764 = vmatprep.subr.bf16.mxu0 %v1247
        %1765 = vmatpush1.bf16.msra.mxu0 %v1246
        %1766 = vmatprep.subr.bf16.mxu0 %v1251
        %1767 = vmatpush1.bf16.msra.mxu0 %v1250
        %1768 = vmatprep.subr.bf16.mxu0 %v1255
        %1769 = vmatpush1.bf16.msra.mxu0 %v1254
        %1770 = vmatprep.subr.bf16.mxu0 %v1259
        %1771 = vmatpush1.bf16.msra.mxu0 %v1258
        %1772 = vmatprep.subr.bf16.mxu0 %v1263
        %1773 = vmatpush1.bf16.msra.mxu0 %v1262
        %1774 = vmatprep.subr.bf16.mxu0 %v1267
        %1775 = vmatpush1.bf16.msra.mxu0 %v1266
        %1776 = vmatprep.subr.bf16.mxu0 %v1271
        %1777 = vmatpush1.bf16.msra.mxu0 %v1270
        %1778 = vmatprep.subr.bf16.mxu0 %v1275
        %1779 = vmatpush1.bf16.msra.mxu0 %v1274
        %1780 = vmatprep.subr.bf16.mxu0 %v1279
        %1781 = vmatpush1.bf16.msra.mxu0 %v1278
        %1782 = vmatprep.subr.bf16.mxu0 %v1283
        %1783 = vmatpush1.bf16.msra.mxu0 %v1282
        %1784 = vmatprep.mubr.bf16.mxu0 %v385
        %1785 = vmatmul.mubr.bf16.gmra.mrb[0].mxu0 %v384
        %v1786 = vpop.f32.mrb[0].mxu0
        %v1787 = vadd.f32 %v1734, %v1786
        %v1788 = vpop.f32.mrb[0].mxu0
        %v1789 = vadd.f32 %v1736, %v1788
        %v1790 = vpop.f32.mrb[0].mxu0
        %v1791 = vadd.f32 %v1738, %v1790
        %v1792 = vpop.f32.mrb[0].mxu0
        %v1793 = vadd.f32 %v1740, %v1792
        %1794 = vmatprep.mubr.bf16.mxu0 %v387
        %1795 = vmatmul.mubr.bf16.gmra.mrb[0].mxu0 %v386
        %v1796 = vpop.f32.mrb[0].mxu0
        %v1797 = vadd.f32 %v1744, %v1796
        %v1798 = vpop.f32.mrb[0].mxu0
        %v1799 = vadd.f32 %v1746, %v1798
        %v1800 = vpop.f32.mrb[0].mxu0
        %v1801 = vadd.f32 %v1748, %v1800
        %v1802 = vpop.f32.mrb[0].mxu0
        %v1803 = vadd.f32 %v1750, %v1802
        %1804 = vdwg.mxu0
        %1805 = vmatprep.subr.bf16.mxu0 %v1287
        %1806 = vmatpush1.bf16.msra.mxu0 %v1286
        %1807 = vmatprep.subr.bf16.mxu0 %v1291
        %1808 = vmatpush1.bf16.msra.mxu0 %v1290
        %1809 = vmatprep.subr.bf16.mxu0 %v1295
        %1810 = vmatpush1.bf16.msra.mxu0 %v1294
        %1811 = vmatprep.subr.bf16.mxu0 %v1299
        %1812 = vmatpush1.bf16.msra.mxu0 %v1298
        %1813 = vmatprep.subr.bf16.mxu0 %v1303
        %1814 = vmatpush1.bf16.msra.mxu0 %v1302
        %1815 = vmatprep.subr.bf16.mxu0 %v1307
        %1816 = vmatpush1.bf16.msra.mxu0 %v1306
        %1817 = vmatprep.subr.bf16.mxu0 %v1311
        %1818 = vmatpush1.bf16.msra.mxu0 %v1310
        %1819 = vmatprep.subr.bf16.mxu0 %v1315
        %1820 = vmatpush1.bf16.msra.mxu0 %v1314
        %1821 = vmatprep.subr.bf16.mxu0 %v1319
        %1822 = vmatpush1.bf16.msra.mxu0 %v1318
        %1823 = vmatprep.subr.bf16.mxu0 %v1323
        %1824 = vmatpush1.bf16.msra.mxu0 %v1322
        %1825 = vmatprep.subr.bf16.mxu0 %v1327
        %1826 = vmatpush1.bf16.msra.mxu0 %v1326
        %1827 = vmatprep.subr.bf16.mxu0 %v1331
        %1828 = vmatpush1.bf16.msra.mxu0 %v1330
        %1829 = vmatprep.subr.bf16.mxu0 %v1335
        %1830 = vmatpush1.bf16.msra.mxu0 %v1334
        %1831 = vmatprep.subr.bf16.mxu0 %v1339
        %1832 = vmatpush1.bf16.msra.mxu0 %v1338
        %1833 = vmatprep.subr.bf16.mxu0 %v1343
        %1834 = vmatpush1.bf16.msra.mxu0 %v1342
        %1835 = vmatprep.subr.bf16.mxu0 %v1347
        %1836 = vmatpush1.bf16.msra.mxu0 %v1346
        %1837 = vmatprep.mubr.bf16.mxu0 %v365
        %1838 = vmatmul.mubr.bf16.gmra.mrb[0].mxu0 %v364
        %v1839 = vpop.f32.mrb[0].mxu0
        %v1840 = vadd.f32 %v1787, %v1839
        %v1841 = vpop.f32.mrb[0].mxu0
        %v1842 = vadd.f32 %v1789, %v1841
        %v1843 = vpop.f32.mrb[0].mxu0
        %v1844 = vadd.f32 %v1791, %v1843
        %v1845 = vpop.f32.mrb[0].mxu0
        %v1846 = vadd.f32 %v1793, %v1845
        %1847 = vmatprep.mubr.bf16.mxu0 %v367
        %1848 = vmatmul.mubr.bf16.gmra.mrb[0].mxu0 %v366
        %v1849 = vpop.f32.mrb[0].mxu0
        %v1850 = vadd.f32 %v1797, %v1849
        %v1851 = vpop.f32.mrb[0].mxu0
        %v1852 = vadd.f32 %v1799, %v1851
        %v1853 = vpop.f32.mrb[0].mxu0
        %v1854 = vadd.f32 %v1801, %v1853
        %v1855 = vpop.f32.mrb[0].mxu0
        %v1856 = vadd.f32 %v1803, %v1855
        %1857 = vdwg.mxu0
        %v1858 = vmul.f32 %v1681, %v1681
        %v1859 = vmul.f32 %v1683, %v1683
        %v1860 = vmul.f32 %v1685, %v1685
        %v1861 = vmul.f32 %v1687, %v1687
        %v1862 = vmul.f32 %v1691, %v1691
        %v1863 = vmul.f32 %v1693, %v1693
        %v1864 = vmul.f32 %v1695, %v1695
        %v1865 = vmul.f32 %v1697, %v1697
        %v1866 = vmul.f32 %v1840, %v1840
        %v1867 = vmul.f32 %v1842, %v1842
        %v1868 = vmul.f32 %v1844, %v1844
        %v1869 = vmul.f32 %v1846, %v1846
        %v1870 = vmul.f32 %v1850, %v1850
        %v1871 = vmul.f32 %v1852, %v1852
        %v1872 = vmul.f32 %v1854, %v1854
        %v1873 = vmul.f32 %v1856, %v1856
        %v1874 = vadd.f32 %v1858, %v1866
        %v1875 = vadd.f32 %v1859, %v1867
        %v1876 = vadd.f32 %v1860, %v1868
        %v1877 = vadd.f32 %v1861, %v1869
        %v1878 = vadd.f32 %v1862, %v1870
        %v1879 = vadd.f32 %v1863, %v1871
        %v1880 = vadd.f32 %v1864, %v1872
        %v1881 = vadd.f32 %v1865, %v1873
        %v1882 = vadd.f32 %v1874, 1e-10
        %v1883 = vadd.f32 %v1875, 1e-10
        %v1884 = vadd.f32 %v1876, 1e-10
        %v1885 = vadd.f32 %v1877, 1e-10
        %v1886 = vadd.f32 %v1878, 1e-10
        %v1887 = vadd.f32 %v1879, 1e-10
        %v1888 = vadd.f32 %v1880, 1e-10
        %v1889 = vadd.f32 %v1881, 1e-10
        %v1890 = vrsqrt.pop %v1882
        %v1891 = vmul.f32 %v1882, %v1890
        %vm1892 = vcmp.eq.f32.partialorder %v1882, inf
        %v1893 = vsel %vm1892, %v1882, %v1891
        %vm1894 = vcmp.eq.f32.partialorder %v1882, 0.0
        %v1895 = vand.u32 %v1882, 2147483648
        %v1896 = vsel %vm1894, %v1895, %v1893
        %v1897 = vrsqrt.pop %v1883
        %v1898 = vmul.f32 %v1883, %v1897
        %vm1899 = vcmp.eq.f32.partialorder %v1883, inf
        %v1900 = vsel %vm1899, %v1883, %v1898
        %vm1901 = vcmp.eq.f32.partialorder %v1883, 0.0
        %v1902 = vand.u32 %v1883, 2147483648
        %v1903 = vsel %vm1901, %v1902, %v1900
        %v1904 = vrsqrt.pop %v1884
        %v1905 = vmul.f32 %v1884, %v1904
        %vm1906 = vcmp.eq.f32.partialorder %v1884, inf
        %v1907 = vsel %vm1906, %v1884, %v1905
        %vm1908 = vcmp.eq.f32.partialorder %v1884, 0.0
        %v1909 = vand.u32 %v1884, 2147483648
        %v1910 = vsel %vm1908, %v1909, %v1907
        %v1911 = vrsqrt.pop %v1885
        %v1912 = vmul.f32 %v1885, %v1911
        %vm1913 = vcmp.eq.f32.partialorder %v1885, inf
        %v1914 = vsel %vm1913, %v1885, %v1912
        %vm1915 = vcmp.eq.f32.partialorder %v1885, 0.0
        %v1916 = vand.u32 %v1885, 2147483648
        %v1917 = vsel %vm1915, %v1916, %v1914
        %v1918 = vrsqrt.pop %v1886
        %v1919 = vmul.f32 %v1886, %v1918
        %vm1920 = vcmp.eq.f32.partialorder %v1886, inf
        %v1921 = vsel %vm1920, %v1886, %v1919
        %vm1922 = vcmp.eq.f32.partialorder %v1886, 0.0
        %v1923 = vand.u32 %v1886, 2147483648
        %v1924 = vsel %vm1922, %v1923, %v1921
        %v1925 = vrsqrt.pop %v1887
        %v1926 = vmul.f32 %v1887, %v1925
        %vm1927 = vcmp.eq.f32.partialorder %v1887, inf
        %v1928 = vsel %vm1927, %v1887, %v1926
        %vm1929 = vcmp.eq.f32.partialorder %v1887, 0.0
        %v1930 = vand.u32 %v1887, 2147483648
        %v1931 = vsel %vm1929, %v1930, %v1928
        %v1932 = vrsqrt.pop %v1888
        %v1933 = vmul.f32 %v1888, %v1932
        %vm1934 = vcmp.eq.f32.partialorder %v1888, inf
        %v1935 = vsel %vm1934, %v1888, %v1933
        %vm1936 = vcmp.eq.f32.partialorder %v1888, 0.0
        %v1937 = vand.u32 %v1888, 2147483648
        %v1938 = vsel %vm1936, %v1937, %v1935
        %v1939 = vrsqrt.pop %v1889
        %v1940 = vmul.f32 %v1889, %v1939
        %vm1941 = vcmp.eq.f32.partialorder %v1889, inf
        %v1942 = vsel %vm1941, %v1889, %v1940
        %vm1943 = vcmp.eq.f32.partialorder %v1889, 0.0
        %v1944 = vand.u32 %v1889, 2147483648
        %v1945 = vsel %vm1943, %v1944, %v1942
        %1946 = vst [vmem:[%s320] sm:$0xff] %v1896
        %1947 = vst [vmem:[%s320 + $0x8] sm:$0xff] %v1903
        %1948 = vst [vmem:[%s320 + $0x10] sm:$0xff] %v1910
        %1949 = vst [vmem:[%s320 + $0x18] sm:$0xff] %v1917
        %1950 = vst [vmem:[%s320 + $0x20] sm:$0xff] %v1924
        %1951 = vst [vmem:[%s320 + $0x28] sm:$0xff] %v1931
        %1952 = vst [vmem:[%s320 + $0x30] sm:$0xff] %v1938
        %1953 = vst [vmem:[%s320 + $0x38] sm:$0xff] %v1945
        %1954 = vst [vmem:[%s325] sm:$0xff] %v1681
        %1955 = vst [vmem:[%s325 + $0x8] sm:$0xff] %v1683
        %1956 = vst [vmem:[%s325 + $0x10] sm:$0xff] %v1685
        %1957 = vst [vmem:[%s325 + $0x18] sm:$0xff] %v1687
        %1958 = vst [vmem:[%s325 + $0x20] sm:$0xff] %v1691
        %1959 = vst [vmem:[%s325 + $0x28] sm:$0xff] %v1693
        %1960 = vst [vmem:[%s325 + $0x30] sm:$0xff] %v1695
        %1961 = vst [vmem:[%s325 + $0x38] sm:$0xff] %v1697
        %1962 = vst [vmem:[%s330] sm:$0xff] %v1840
        %1963 = vst [vmem:[%s330 + $0x8] sm:$0xff] %v1842
        %1964 = vst [vmem:[%s330 + $0x10] sm:$0xff] %v1844
        %1965 = vst [vmem:[%s330 + $0x18] sm:$0xff] %v1846
        %1966 = vst [vmem:[%s330 + $0x20] sm:$0xff] %v1850
        %1967 = vst [vmem:[%s330 + $0x28] sm:$0xff] %v1852
        %1968 = vst [vmem:[%s330 + $0x30] sm:$0xff] %v1854
        %1969 = vst [vmem:[%s330 + $0x38] sm:$0xff] %v1856
        %v1970 = vmul.f32 %v1896, %v1896
        %v1971 = vmul.f32 %v1903, %v1903
        %v1972 = vadd.f32 %v1970, 1e-08
        %v1973 = vadd.f32 %v1971, 1e-08
        %v1974 = vlog2.pop %v1972
        %v1975 = vmul.f32 %v1974, 0.6931472
        %v1976 = vlog2.pop %v1973
        %v1977 = vmul.f32 %v1976, 0.6931472
        %v1978 = vlaneseq
        %v1979 = vand.u32 %v1978, 127
        %v1980 = vadd.s32 %v1979, 128
        %vm1981 = vcmp.lt.s32.totalorder %v1979, 129
        %vm1982 = vcmp.lt.s32.totalorder %v1980, 129
        %v1983 = vsel %vm1981, %v1975, 0.0
        %v1984 = vsel %vm1982, %v1977, 0.0
        %v1985 = vadd.f32 %v1983, %v1984
        %1986 = vadd.xlane.f32.xlu0 %v1985
        %v1987 = vpop.xlane.xlu0 %1986
        %v1988 = vmul.f32 %v1987, 0.007751938
        %v1989 = vsub.f32 %v1975, %v1988
        %v1990 = vsub.f32 %v1977, %v1988
        %v1991 = vsel %vm1981, %v1989, 0.0
        %v1992 = vsel %vm1982, %v1990, 0.0
        %v1993 = vmul.f32 %v1991, %v1991
        %v1994 = vmul.f32 %v1992, %v1992
        %v1995 = vadd.f32 %v1993, %v1994
        %1996 = vadd.xlane.f32.xlu0 %v1995
        %v1997 = vpop.xlane.xlu0 %1996
        %v1998 = vmul.f32 %v1997, 0.007751938
        %v1999 = vld [vmem:[%s2] sm:$0x3]
        %v2000 = vld [vmem:[%s3] sm:$0x3]
        %v2001 = vadd.f32 %v1998, 1e-05
        %v2002 = vrsqrt.pop %v2001
        %v2003 = vmul.f32 %v1989, %v2002
        %v2004 = vmul.f32 %v1990, %v2002
        %v2006 = vlaneseq
        %v2007 = vshrl.u32 %v2006, 7
        %v2008 = vsub.s32 0, %v2007
        %v2009 = vrot.slane %v1999, %v2008
        %v2010 = vlaneseq
        %v2011 = vshrl.u32 %v2010, 7
        %v2012 = vsub.s32 1, %v2011
        %v2013 = vrot.slane %v1999, %v2012
        %v2016 = vmul.f32 %v2003, %v2009
        %v2017 = vmul.f32 %v2004, %v2013
        %v2019 = vlaneseq
        %v2020 = vshrl.u32 %v2019, 7
        %v2021 = vsub.s32 0, %v2020
        %v2022 = vrot.slane %v2000, %v2021
        %v2023 = vlaneseq
        %v2024 = vshrl.u32 %v2023, 7
        %v2025 = vsub.s32 1, %v2024
        %v2026 = vrot.slane %v2000, %v2025
        %v2029 = vadd.f32 %v2016, %v2022
        %v2030 = vadd.f32 %v2017, %v2026
        %v2031 = vmul.f32 %v1681, %v1685
        %v2032 = vmul.f32 %v1683, %v1687
        %v2033 = vmul.f32 %v1840, %v1844
        %v2034 = vmul.f32 %v1842, %v1846
        %v2035 = vadd.f32 %v2031, %v2033
        %v2036 = vadd.f32 %v2032, %v2034
        %v2037 = vmul.f32 %v1896, %v1910
        %v2038 = vmul.f32 %v1903, %v1917
        %v2039 = vrcp.pop %v2037
        %v2040 = vrcp.pop %v2038
        %v2041 = vmul.f32 %v2035, %v2039
        %v2042 = vmul.f32 %v2036, %v2040
        %v2043 = vmul.f32 %v1685, %v1691
        %v2044 = vmul.f32 %v1687, %v1693
        %v2045 = vmul.f32 %v1844, %v1850
        %v2046 = vmul.f32 %v1846, %v1852
        %v2047 = vadd.f32 %v2043, %v2045
        %v2048 = vadd.f32 %v2044, %v2046
        %v2049 = vmul.f32 %v1910, %v1924
        %v2050 = vmul.f32 %v1917, %v1931
        %v2051 = vrcp.pop %v2049
        %v2052 = vrcp.pop %v2050
        %v2053 = vmul.f32 %v2047, %v2051
        %v2054 = vmul.f32 %v2048, %v2052
        %v2055 = vmul.f32 %v1691, %v1695
        %v2056 = vmul.f32 %v1693, %v1697
        %v2057 = vmul.f32 %v1850, %v1854
        %v2058 = vmul.f32 %v1852, %v1856
        %v2059 = vadd.f32 %v2055, %v2057
        %v2060 = vadd.f32 %v2056, %v2058
        %v2061 = vmul.f32 %v1924, %v1938
        %v2062 = vmul.f32 %v1931, %v1945
        %v2063 = vrcp.pop %v2061
        %v2064 = vrcp.pop %v2062
        %v2065 = vmul.f32 %v2059, %v2063
        %v2066 = vmul.f32 %v2060, %v2064
        %v2067 = vmul.f32 %v1681, %v1695
        %v2068 = vmul.f32 %v1683, %v1697
        %v2069 = vmul.f32 %v1840, %v1854
        %v2070 = vmul.f32 %v1842, %v1856
        %v2071 = vadd.f32 %v2067, %v2069
        %v2072 = vadd.f32 %v2068, %v2070
        %v2073 = vmul.f32 %v1896, %v1938
        %v2074 = vmul.f32 %v1903, %v1945
        %v2075 = vrcp.pop %v2073
        %v2076 = vrcp.pop %v2074
        %v2077 = vmul.f32 %v2071, %v2075
        %v2078 = vmul.f32 %v2072, %v2076
        %2079 = vst [vmem:[%s315] sm:$0xff] %v2029
        %2080 = vst [vmem:[%s315 + $0x8] sm:$0xff] %v2030
        %2081 = vst [vmem:[%s315 + $0x10] sm:$0xff] %v2041
        %2082 = vst [vmem:[%s315 + $0x18] sm:$0xff] %v2042
        %2083 = vst [vmem:[%s315 + $0x20] sm:$0xff] %v2053
        %2084 = vst [vmem:[%s315 + $0x28] sm:$0xff] %v2054
        %2085 = vst [vmem:[%s315 + $0x30] sm:$0xff] %v2065
        %2086 = vst [vmem:[%s315 + $0x38] sm:$0xff] %v2066
        %2087 = vst [vmem:[%s315 + $0x40] sm:$0xff] %v2077
        %2088 = vst [vmem:[%s315 + $0x48] sm:$0xff] %v2078
        %p2089 = scmp.lt.s32.totalorder %s20, 1
        %s2090 = scalar_select %p2089, %s20, 1
        %s2091 = smul.addr %s2090, 10
        %s2092 = smul.addr %s2091, 8
        %s2093 = scalar_lea.vmem %s4, %s2092
        %p2094 = scmp.lt.s32.totalorder %s20, 1
        %s2095 = scalar_select %p2094, %s20, 1
        %s2096 = smul.addr %s2095, 8
        %s2097 = smul.addr %s2096, 8
        %s2098 = scalar_lea.vmem %s5, %s2097
        %p2099 = scmp.lt.s32.totalorder %s20, 1
        %s2100 = scalar_select %p2099, %s20, 1
        %s2101 = smul.addr %s2100, 8
        %s2102 = smul.addr %s2101, 8
        %s2103 = scalar_lea.vmem %s6, %s2102
        %p2104 = scmp.lt.s32.totalorder %s20, 1
        %s2105 = scalar_select %p2104, %s20, 1
        %s2106 = smul.addr %s2105, 8
        %s2107 = smul.addr %s2106, 8
        %s2108 = scalar_lea.vmem %s7, %s2107
        // Predicated region
        $region41: #{df_computer_forward.1} parent=35 // pred_check
          %p2109 = pneg %p127
        $region42: #{df_computer_forward.1} parent=35 // pred_check_branch
          %2111 = sbr.rel (%p2109) target = $region44
        $region43: #{df_computer_forward.1} parent=35 // pred_region
          _
        $region44: #{df_computer_forward.1} parent=35 // pred_fallthru
          _
        // Predicated region
        $region45: #{df_computer_forward.1} parent=35 // pred_check
          %p2112 = pneg %p153
        $region46: #{df_computer_forward.1} parent=35 // pred_check_branch
          %2114 = sbr.rel (%p2112) target = $region48
        $region47: #{df_computer_forward.1} parent=35 // pred_region
          _
        $region48: #{df_computer_forward.1} parent=35 // pred_fallthru
          _
        // Predicated region
        $region49: #{df_computer_forward.1} parent=35 // pred_check
          %p2115 = pneg %p179
        $region50: #{df_computer_forward.1} parent=35 // pred_check_branch
          %2117 = sbr.rel (%p2115) target = $region52
        $region51: #{df_computer_forward.1} parent=35 // pred_region
          _
        $region52: #{df_computer_forward.1} parent=35 // pred_fallthru
          _
        // Predicated region
        $region53: #{df_computer_forward.1} parent=35 // pred_check
          %p2118 = pneg %p205
        $region54: #{df_computer_forward.1} parent=35 // pred_check_branch
          %2120 = sbr.rel (%p2118) target = $region56
        $region55: #{df_computer_forward.1} parent=35 // pred_region
          _
        $region56: #{df_computer_forward.1} parent=35 // pred_fallthru
          _
      $region36: #{df_computer_forward.1} parent=5 // pred_fallthru
        _
      %p2121 = scmp.le.s32.totalorder 2, %s15
      // Predicated region
      $region57: #{df_computer_forward.1} parent=5 // pred_check
        %p2122 = pneg %p2121
      $region58: #{df_computer_forward.1} parent=5 // pred_check_branch
        %2124 = sbr.rel (%p2122) target = $region60
      $region59: #{df_computer_forward.1} parent=5 // pred_region
        %s2125 = ssub.s32 %s15, 2
        // Predicated region
        $region61: #{df_computer_forward.1} parent=59 // pred_check
          %p2126 = pneg %p133
        $region62: #{df_computer_forward.1} parent=59 // pred_check_branch
          %2128 = sbr.rel (%p2126) target = $region64
        $region63: #{df_computer_forward.1} parent=59 // pred_region
          %p2129 = scmp.lt.s32.totalorder %s21, 1
          %s2130 = scalar_select %p2129, %s21, 1
          %s2131 = smul.addr %s2130, 10
          %s2132 = smul.addr %s2131, 8
          %s2133 = scalar_lea.vmem %s4, %s2132
        $region64: #{df_computer_forward.1} parent=59 // pred_fallthru
          _
        // Predicated region
        $region65: #{df_computer_forward.1} parent=59 // pred_check
          %p2134 = pneg %p159
        $region66: #{df_computer_forward.1} parent=59 // pred_check_branch
          %2136 = sbr.rel (%p2134) target = $region68
        $region67: #{df_computer_forward.1} parent=59 // pred_region
          %p2137 = scmp.lt.s32.totalorder %s21, 1
          %s2138 = scalar_select %p2137, %s21, 1
          %s2139 = smul.addr %s2138, 8
          %s2140 = smul.addr %s2139, 8
          %s2141 = scalar_lea.vmem %s5, %s2140
        $region68: #{df_computer_forward.1} parent=59 // pred_fallthru
          _
        // Predicated region
        $region69: #{df_computer_forward.1} parent=59 // pred_check
          %p2142 = pneg %p185
        $region70: #{df_computer_forward.1} parent=59 // pred_check_branch
          %2144 = sbr.rel (%p2142) target = $region72
        $region71: #{df_computer_forward.1} parent=59 // pred_region
          %p2145 = scmp.lt.s32.totalorder %s21, 1
          %s2146 = scalar_select %p2145, %s21, 1
          %s2147 = smul.addr %s2146, 8
          %s2148 = smul.addr %s2147, 8
          %s2149 = scalar_lea.vmem %s6, %s2148
        $region72: #{df_computer_forward.1} parent=59 // pred_fallthru
          _
        // Predicated region
        $region73: #{df_computer_forward.1} parent=59 // pred_check
          %p2150 = pneg %p211
        $region74: #{df_computer_forward.1} parent=59 // pred_check_branch
          %2152 = sbr.rel (%p2150) target = $region76
        $region75: #{df_computer_forward.1} parent=59 // pred_region
          %p2153 = scmp.lt.s32.totalorder %s21, 1
          %s2154 = scalar_select %p2153, %s21, 1
          %s2155 = smul.addr %s2154, 8
          %s2156 = smul.addr %s2155, 8
          %s2157 = scalar_lea.vmem %s7, %s2156
        $region76: #{df_computer_forward.1} parent=59 // pred_fallthru
          _
      $region60: #{df_computer_forward.1} parent=5 // pred_fallthru
        _
    $region6: #{df_computer_forward.1} parent=1 // loop_footer
      %s19 = sadd.s32 1, %s15
    $region7: #{df_computer_forward.1} parent=1 // loop_footer_branch
      %14 = sbr.rel target = $region3
    $region8: #{df_computer_forward.1} parent=1 // loop_exit
      _
    %2158 = vsyncpa [#allocation3], 1
    %s2159 = scalar_lea.sflag [#allocation3], 1
    %2160 = vsyncpa %s2159, 1

</llo_original>
